<compile_context>
chip_gen: v5e
topology: v5e:2x2
jax: 0.10.0
libtpu: 0.0.40
codegen_flags: <defaults>
</compile_context>

<pallas_src>
from functools import partial

import jax
import jax.numpy as jnp
from jax.experimental import pallas as pl
from jax.experimental.pallas import tpu as pltpu

# ----------------------------- configuration ------------------------------
PAD_IDX = 1
VOCAB_SIZE = 50
NUM_LAYERS = 2
EMBED_DIM = 32           # C
FFN_DIM = 64             # ffn_embedding_dim
NUM_HEADS = 4            # head_dim = 8
HEAD_DIM = EMBED_DIM // NUM_HEADS
MAX_SEQ_LEN = 16
NUM_SEGMENTS = 2
BATCH = 2
SEQ = 8
LN_EPS = 1e-5
NEG_INF = -1e30
N_SMALL = 8              # rows in the packed small-parameter array


# ------------------------------ Pallas kernel ------------------------------
def _encoder_stack_kernel(x_ref, kbias_ref, wqkv_ref, bqkv_ref, wo_ref,
                          fc1_ref, fc2_ref, small_ref, out_ref, x_scr):
    """Whole post-norm encoder stack; grid = (batch, layer).

    One grid step = one (batch row, layer).  The running activation for the
    current batch row lives in `x_scr` (VMEM) across the layer axis.
    """
    layer = pl.program_id(1)
    T, C = x_scr.shape
    H = NUM_HEADS
    scaling = 1.0 / float(HEAD_DIM) ** 0.5

    @pl.when(layer == 0)
    def _():                                   # load this batch row's embedding
        x_scr[...] = x_ref[0]

    x = x_scr[...]                             # (T, C) f32, resident activation

    # Packed small params (f32): rows = [b_o, ln1_g, ln1_b, fc1_b, fc2_b,
    #                                    ln2_g, ln2_b, pad]; C-wide in [:C].
    sm = small_ref[0]                          # (N_SMALL, FFN_DIM)
    b_o = sm[0:1, :C]
    ln1_g, ln1_b = sm[1:2, :C], sm[2:3, :C]
    fc1_b = sm[3:4, :]                         # (1, FFN)
    fc2_b = sm[4:5, :C]
    ln2_g, ln2_b = sm[5:6, :C], sm[6:7, :C]

    def layer_norm(v, g, b):
        mu = jnp.mean(v, axis=-1, keepdims=True)
        var = jnp.mean((v - mu) ** 2, axis=-1, keepdims=True)
        return (v - mu) * jax.lax.rsqrt(var + LN_EPS) * g + b

    # --- multihead self-attention (fairseq MultiheadAttention, eval) ---
    # QKV projection, all 3*H heads as one batched contraction (no lane slices).
    x_bf = x.astype(jnp.bfloat16)
    x_b = jnp.broadcast_to(x_bf[None], (3 * H, T, C))            # (3H, T, C)
    qkv = jnp.einsum("htc,hcd->htd", x_b, wqkv_ref[0],
                     preferred_element_type=jnp.float32)         # (3H, T, Dh)
    qkv = qkv + bqkv_ref[0]                                      # +bias (3H,1,Dh)
    q = (qkv[:H] * scaling).astype(jnp.bfloat16)                 # (H, T, Dh)
    k = qkv[H:2 * H].astype(jnp.bfloat16)
    v = qkv[2 * H:].astype(jnp.bfloat16)

    s = jnp.einsum("hqd,hkd->hqk", q, k,
                   preferred_element_type=jnp.float32)           # (H, T, T)
    s = s + kbias_ref[0]                       # key-padding bias (1, T), bcast
    m = jnp.max(s, axis=-1, keepdims=True)
    e = jnp.exp(s - m)
    p = e * pl.reciprocal(jnp.sum(e, axis=-1, keepdims=True), approx=True)

    ctx = jnp.einsum("hqk,hkd->hqd", p.astype(jnp.bfloat16), v,
                     preferred_element_type=jnp.float32)         # (H, T, Dh)
    # Output projection with per-head weight slabs, then sum over heads
    # (== concat(heads) @ W_o, without any lane-sparse relayout).
    attn = jnp.einsum("htd,hdc->htc", ctx.astype(jnp.bfloat16), wo_ref[0],
                      preferred_element_type=jnp.float32)        # (H, T, C)
    attn_out = jnp.sum(attn, axis=0) + b_o                       # (T, C)

    x1 = layer_norm(x + attn_out, ln1_g, ln1_b)

    # --- feed-forward (relu), residual, final layer norm ---
    h1 = jnp.dot(x1.astype(jnp.bfloat16), fc1_ref[0],
                 preferred_element_type=jnp.float32) + fc1_b
    h1 = jnp.maximum(h1, 0.0)
    h2 = jnp.dot(h1.astype(jnp.bfloat16), fc2_ref[0],
                 preferred_element_type=jnp.float32) + fc2_b
    y = layer_norm(x1 + h2, ln2_g, ln2_b)

    x_scr[...] = y                             # keep resident for next layer
    out_ref[0, 0] = y                          # per-layer output block


def encoder_stack(x, key_bias, sp):
    """x: (B, T, C) f32; key_bias: (B, 1, T) f32. Returns (L, B, T, C) f32."""
    B, T, C = x.shape
    L = NUM_LAYERS
    H = NUM_HEADS
    return pl.pallas_call(
        _encoder_stack_kernel,
        out_shape=jax.ShapeDtypeStruct((L, B, T, C), jnp.float32),
        grid=(B, L),
        in_specs=[
            pl.BlockSpec((1, T, C), lambda b, l: (b, 0, 0)),                 # x
            pl.BlockSpec((1, 1, T), lambda b, l: (b, 0, 0)),                 # key bias
            pl.BlockSpec((1, 3 * H, C, HEAD_DIM), lambda b, l: (l, 0, 0, 0)),  # w_qkv
            pl.BlockSpec((1, 3 * H, 1, HEAD_DIM), lambda b, l: (l, 0, 0, 0)),  # b_qkv
            pl.BlockSpec((1, H, HEAD_DIM, C), lambda b, l: (l, 0, 0, 0)),    # w_o
            pl.BlockSpec((1, C, FFN_DIM), lambda b, l: (l, 0, 0)),           # fc1_w
            pl.BlockSpec((1, FFN_DIM, C), lambda b, l: (l, 0, 0)),           # fc2_w
            pl.BlockSpec((1, N_SMALL, FFN_DIM), lambda b, l: (l, 0, 0)),     # small
        ],
        out_specs=pl.BlockSpec((1, 1, T, C), lambda b, l: (l, b, 0, 0)),
        scratch_shapes=[pltpu.VMEM((T, C), jnp.float32)],
        compiler_params=pltpu.CompilerParams(
            dimension_semantics=("parallel", "arbitrary")),
    )(x, key_bias, sp["w_qkv"], sp["b_qkv"], sp["w_o"],
      sp["fc1_w"], sp["fc2_w"], sp["small"])


# ------------------------- parameters (deterministic) ----------------------
def init_params(key):
    std = 0.02
    keys = jax.random.split(key, 3 + NUM_LAYERS)

    def normal(k, shape):
        return (std * jax.random.normal(k, shape)).astype(jnp.float32)

    embed_tokens = normal(keys[0], (VOCAB_SIZE, EMBED_DIM)).at[PAD_IDX].set(0.0)
    num_pos = MAX_SEQ_LEN + PAD_IDX + 1                  # learned pos embedding
    embed_positions = normal(keys[1], (num_pos, EMBED_DIM)).at[PAD_IDX].set(0.0)
    segment_embeddings = normal(keys[2], (NUM_SEGMENTS, EMBED_DIM))

    C, F, H, Dh = EMBED_DIM, FFN_DIM, NUM_HEADS, HEAD_DIM
    w_qkv, b_qkv, w_o, fc1_w, fc2_w, small = [], [], [], [], [], []
    for l in range(NUM_LAYERS):
        lk = jax.random.split(keys[3 + l], 6)
        # (in, out) layout; per-head slabs so the kernel never lane-slices heads.
        wq, wk, wv = (normal(lk[i], (C, C)) for i in range(3))
        wqkv = jnp.stack([wq, wk, wv], 0)                        # (3, C, C)
        wqkv = wqkv.reshape(3, C, H, Dh).transpose(0, 2, 1, 3)   # (3, H, C, Dh)
        w_qkv.append(wqkv.reshape(3 * H, C, Dh))
        b_qkv.append(jnp.zeros((3 * H, 1, Dh), jnp.float32))     # zero biases
        w_o.append(normal(lk[3], (C, C)).reshape(H, Dh, C))      # (H, Dh, C)
        fc1_w.append(normal(lk[4], (C, F)))
        fc2_w.append(normal(lk[5], (F, C)))
        # packed small params: [b_o, ln1_g, ln1_b, fc1_b, fc2_b, ln2_g, ln2_b, pad]
        sm = jnp.zeros((N_SMALL, F), jnp.float32)
        sm = sm.at[1, :C].set(1.0)   # ln1 gamma
        sm = sm.at[5, :C].set(1.0)   # ln2 gamma
        small.append(sm)

    stacked = dict(
        w_qkv=jnp.stack(w_qkv).astype(jnp.bfloat16),
        b_qkv=jnp.stack(b_qkv),
        w_o=jnp.stack(w_o).astype(jnp.bfloat16),
        fc1_w=jnp.stack(fc1_w).astype(jnp.bfloat16),
        fc2_w=jnp.stack(fc2_w).astype(jnp.bfloat16),
        small=jnp.stack(small),
    )
    return dict(embed_tokens=embed_tokens, embed_positions=embed_positions,
                segment_embeddings=segment_embeddings, stacked=stacked)


# ----------------------------- forward pass --------------------------------
@partial(jax.jit, static_argnames=("last_state_only",))
def transformer_sentence_encoder_forward(params, tokens, segment_labels,
                                         last_state_only=False):
    """Mirrors TransformerSentenceEncoder.forward (eval-mode defaults)."""
    # --- embeddings (glue: gathers in plain JAX) ---
    tok_emb = jnp.take(params["embed_tokens"], tokens, axis=0)
    # fairseq utils.make_positions: pads map to padding_idx position
    nonpad = (tokens != PAD_IDX).astype(jnp.int32)
    positions = jnp.cumsum(nonpad, axis=1) * nonpad + PAD_IDX
    pos_emb = jnp.take(params["embed_positions"], positions, axis=0)
    seg_emb = jnp.take(params["segment_embeddings"], segment_labels, axis=0)
    x = (tok_emb + pos_emb + seg_emb).astype(jnp.float32)
    # TODO(synk): dropout omitted — module is evaluated with self.training=False.

    # Padding handled unconditionally (exact no-op when there is no padding);
    # avoids the host-sync data-dependent branch of the torch reference.
    pad_mask = (tokens == PAD_IDX).astype(jnp.float32)           # (B, T)
    x = x * (1.0 - pad_mask[..., None])
    key_bias = (pad_mask * NEG_INF)[:, None, :]                  # (B, 1, T)

    layer_out = encoder_stack(x, key_bias, params["stacked"])    # (L, B, T, C)

    inner_states = []
    if not last_state_only:
        inner_states.append(jnp.transpose(x, (1, 0, 2)))         # T x B x C
        for l in range(NUM_LAYERS):
            inner_states.append(jnp.transpose(layer_out[l], (1, 0, 2)))

    x_btc = layer_out[-1]                                        # (B, T, C)
    sentence_rep = x_btc[:, 0, :]                                # B x C
    if last_state_only:
        inner_states = [x_btc]
    return inner_states, sentence_rep


# ---------------------------------- main ------------------------------------
if __name__ == "__main__":
    key = jax.random.PRNGKey(0)
    pkey, tkey, skey = jax.random.split(key, 3)
    params = init_params(pkey)

    tokens = jax.random.randint(tkey, (BATCH, SEQ), 2, VOCAB_SIZE,
                                dtype=jnp.int32)
    tokens = tokens.at[0, 6:].set(PAD_IDX)     # add some padding
    tokens = tokens.at[1, 7:].set(PAD_IDX)
    segment_labels = jax.random.randint(skey, (BATCH, SEQ), 0, NUM_SEGMENTS,
                                        dtype=jnp.int32)

    inner_states, sentence_rep = transformer_sentence_encoder_forward(
        params, tokens, segment_labels)
    jax.block_until_ready(sentence_rep)
    for s in inner_states:
        jax.block_until_ready(s)

    assert sentence_rep.shape == (BATCH, EMBED_DIM)
    assert len(inner_states) == NUM_LAYERS + 1
    assert all(s.shape == (SEQ, BATCH, EMBED_DIM) for s in inner_states)
    assert bool(jnp.all(jnp.isfinite(sentence_rep)))
    print("KERNEL_OK")
</pallas_src>

<mosaic_0001>
module attributes {stable_mosaic.version = 11 : i64} {
  func.func @_encoder_stack_kernel(%arg0: i32, %arg1: i32, %arg2: memref<1x8x32xf32, #tpu.memory_space<vmem>>, %arg3: memref<1x1x8xf32, #tpu.memory_space<vmem>>, %arg4: memref<1x12x32x8xbf16, #tpu.memory_space<vmem>>, %arg5: memref<1x12x1x8xf32, #tpu.memory_space<vmem>>, %arg6: memref<1x4x8x32xbf16, #tpu.memory_space<vmem>>, %arg7: memref<1x32x64xbf16, #tpu.memory_space<vmem>>, %arg8: memref<1x64x32xbf16, #tpu.memory_space<vmem>>, %arg9: memref<1x8x64xf32, #tpu.memory_space<vmem>>, %arg10: memref<1x1x8x32xf32, #tpu.memory_space<vmem>>, %arg11: memref<8x32xf32, #tpu.memory_space<vmem>>) attributes {dimension_semantics = [#tpu.dimension_semantics<parallel>, #tpu.dimension_semantics<arbitrary>], iteration_bounds = array<i64: 2, 2>, scalar_prefetch = 0 : i64, scratch_operands = 1 : i64, tpu.core_type = #tpu.core_type<tc>, window_params = [{transform_indices = @transform_0, window_bounds = array<i64: 1, 8, 32>}, {transform_indices = @transform_1, window_bounds = array<i64: 1, 1, 8>}, {transform_indices = @transform_2, window_bounds = array<i64: 1, 12, 32, 8>}, {transform_indices = @transform_3, window_bounds = array<i64: 1, 12, 1, 8>}, {transform_indices = @transform_4, window_bounds = array<i64: 1, 4, 8, 32>}, {transform_indices = @transform_5, window_bounds = array<i64: 1, 32, 64>}, {transform_indices = @transform_6, window_bounds = array<i64: 1, 64, 32>}, {transform_indices = @transform_7, window_bounds = array<i64: 1, 8, 64>}, {transform_indices = @transform_8, window_bounds = array<i64: 1, 1, 8, 32>}]} {
    %c0_i32 = arith.constant 0 : i32
    %0 = arith.cmpi eq, %arg1, %c0_i32 : i32
    %1 = arith.extui %0 : i1 to i32
    %c0_i32_0 = arith.constant 0 : i32
    %2 = arith.cmpi ne, %1, %c0_i32_0 : i32
    scf.if %2 {
      %c0_52 = arith.constant 0 : index
      %c0_53 = arith.constant 0 : index
      %c0_54 = arith.constant 0 : index
      %121 = vector.load %arg2[%c0_52, %c0_53, %c0_54] : memref<1x8x32xf32, #tpu.memory_space<vmem>>, vector<1x8x32xf32>
      %122 = vector.shape_cast %121 : vector<1x8x32xf32> to vector<8x32xf32>
      %c0_55 = arith.constant 0 : index
      %c0_56 = arith.constant 0 : index
      %123 = vector.load %arg11[%c0_55, %c0_56] : memref<8x32xf32, #tpu.memory_space<vmem>>, vector<8x32xf32>
      tpu.vector_store %arg11[%c0_55, %c0_56], %122 {strides = array<i32>} : memref<8x32xf32, #tpu.memory_space<vmem>>, vector<8x32xf32>,
    } else {
    }
    %c0 = arith.constant 0 : index
    %c0_1 = arith.constant 0 : index
    %3 = vector.load %arg11[%c0, %c0_1] : memref<8x32xf32, #tpu.memory_space<vmem>>, vector<8x32xf32>
    %c0_2 = arith.constant 0 : index
    %c0_3 = arith.constant 0 : index
    %c0_4 = arith.constant 0 : index
    %4 = vector.load %arg9[%c0_2, %c0_3, %c0_4] : memref<1x8x64xf32, #tpu.memory_space<vmem>>, vector<1x8x64xf32>
    %5 = vector.shape_cast %4 : vector<1x8x64xf32> to vector<8x64xf32>
    %6 = vector.extract_strided_slice %5 {offsets = [0, 0], sizes = [1, 32], strides = [1, 1]} : vector<8x64xf32> to vector<1x32xf32>
    %7 = vector.extract_strided_slice %5 {offsets = [1, 0], sizes = [1, 32], strides = [1, 1]} : vector<8x64xf32> to vector<1x32xf32>
    %8 = vector.extract_strided_slice %5 {offsets = [2, 0], sizes = [1, 32], strides = [1, 1]} : vector<8x64xf32> to vector<1x32xf32>
    %9 = vector.extract_strided_slice %5 {offsets = [3, 0], sizes = [1, 64], strides = [1, 1]} : vector<8x64xf32> to vector<1x64xf32>
    %10 = vector.extract_strided_slice %5 {offsets = [4, 0], sizes = [1, 32], strides = [1, 1]} : vector<8x64xf32> to vector<1x32xf32>
    %11 = vector.extract_strided_slice %5 {offsets = [5, 0], sizes = [1, 32], strides = [1, 1]} : vector<8x64xf32> to vector<1x32xf32>
    %12 = vector.extract_strided_slice %5 {offsets = [6, 0], sizes = [1, 32], strides = [1, 1]} : vector<8x64xf32> to vector<1x32xf32>
    %13 = arith.truncf %3 : vector<8x32xf32> to vector<8x32xbf16>
    %14 = vector.shape_cast %13 : vector<8x32xbf16> to vector<1x8x32xbf16>
    %15 = vector.shape_cast %14 : vector<1x8x32xbf16> to vector<1x8x32xbf16>
    %16 = vector.broadcast %15 : vector<1x8x32xbf16> to vector<12x8x32xbf16>
    %c0_5 = arith.constant 0 : index
    %c0_6 = arith.constant 0 : index
    %c0_7 = arith.constant 0 : index
    %c0_8 = arith.constant 0 : index
    %17 = vector.load %arg4[%c0_5, %c0_6, %c0_7, %c0_8] : memref<1x12x32x8xbf16, #tpu.memory_space<vmem>>, vector<1x12x32x8xbf16>
    %18 = vector.shape_cast %17 : vector<1x12x32x8xbf16> to vector<12x32x8xbf16>
    "tpu.trace_start"() <{level = 10 : i32, message = "htc,hcd->htd"}> : () -> ()
    %cst = arith.constant dense<0.000000e+00> : vector<12x8x8xf32>
    %19 = tpu.matmul %16, %18, %cst {dimension_numbers = #tpu.dot_dimension_numbers<[2], [1], [1], [2], [0, 0, 0, 1, 1, 2], [0], [0]>} : vector<12x8x32xbf16>, vector<12x32x8xbf16>, vector<12x8x8xf32> -> vector<12x8x8xf32>
    "tpu.trace_stop"() : () -> ()
    %c0_9 = arith.constant 0 : index
    %c0_10 = arith.constant 0 : index
    %c0_11 = arith.constant 0 : index
    %c0_12 = arith.constant 0 : index
    %20 = vector.load %arg5[%c0_9, %c0_10, %c0_11, %c0_12] : memref<1x12x1x8xf32, #tpu.memory_space<vmem>>, vector<1x12x1x8xf32>
    %21 = vector.shape_cast %20 : vector<1x12x1x8xf32> to vector<12x1x8xf32>
    %22 = vector.broadcast %21 : vector<12x1x8xf32> to vector<12x8x8xf32>
    %23 = arith.addf %19, %22 : vector<12x8x8xf32>
    %24 = vector.extract_strided_slice %23 {offsets = [0, 0, 0], sizes = [4, 8, 8], strides = [1, 1, 1]} : vector<12x8x8xf32> to vector<4x8x8xf32>
    %cst_13 = arith.constant 0.353553385 : f32
    %25 = vector.broadcast %cst_13 : f32 to vector<4x8x8xf32>
    %26 = arith.mulf %24, %25 : vector<4x8x8xf32>
    %27 = arith.truncf %26 : vector<4x8x8xf32> to vector<4x8x8xbf16>
    %28 = vector.extract_strided_slice %23 {offsets = [4, 0, 0], sizes = [4, 8, 8], strides = [1, 1, 1]} : vector<12x8x8xf32> to vector<4x8x8xf32>
    %29 = arith.truncf %28 : vector<4x8x8xf32> to vector<4x8x8xbf16>
    %30 = vector.extract_strided_slice %23 {offsets = [8, 0, 0], sizes = [4, 8, 8], strides = [1, 1, 1]} : vector<12x8x8xf32> to vector<4x8x8xf32>
    %31 = arith.truncf %30 : vector<4x8x8xf32> to vector<4x8x8xbf16>
    "tpu.trace_start"() <{level = 10 : i32, message = "hqd,hkd->hqk"}> : () -> ()
    %cst_14 = arith.constant dense<0.000000e+00> : vector<4x8x8xf32>
    %32 = tpu.matmul %27, %29, %cst_14 {dimension_numbers = #tpu.dot_dimension_numbers<[2], [2], [1], [1], [0, 0, 0, 1, 1, 1], [0], [0]>} : vector<4x8x8xbf16>, vector<4x8x8xbf16>, vector<4x8x8xf32> -> vector<4x8x8xf32>
    "tpu.trace_stop"() : () -> ()
    %c0_15 = arith.constant 0 : index
    %c0_16 = arith.constant 0 : index
    %c0_17 = arith.constant 0 : index
    %33 = vector.load %arg3[%c0_15, %c0_16, %c0_17] : memref<1x1x8xf32, #tpu.memory_space<vmem>>, vector<1x1x8xf32>
    %34 = vector.shape_cast %33 : vector<1x1x8xf32> to vector<1x8xf32>
    %35 = vector.shape_cast %34 : vector<1x8xf32> to vector<1x1x8xf32>
    %36 = vector.broadcast %35 : vector<1x1x8xf32> to vector<4x8x8xf32>
    %37 = arith.addf %32, %36 : vector<4x8x8xf32>
    %cst_18 = arith.constant dense<0xFF800000> : vector<4x8xf32>
    %38 = vector.multi_reduction <maximumf>, %37, %cst_18 [2] : vector<4x8x8xf32> to vector<4x8xf32>
    %39 = vector.shape_cast %38 : vector<4x8xf32> to vector<4x8x1xf32>
    %40 = vector.broadcast %39 : vector<4x8x1xf32> to vector<4x8x8xf32>
    %41 = arith.subf %37, %40 : vector<4x8x8xf32>
    %42 = math.exp %41 : vector<4x8x8xf32>
    %cst_19 = arith.constant dense<0.000000e+00> : vector<4x8xf32>
    %43 = vector.multi_reduction <add>, %42, %cst_19 [2] : vector<4x8x8xf32> to vector<4x8xf32>
    %44 = vector.shape_cast %43 : vector<4x8xf32> to vector<4x8x1xf32>
    %45 = tpu.reciprocal %44 {approx = true} : vector<4x8x1xf32> -> vector<4x8x1xf32>
    %46 = vector.broadcast %45 : vector<4x8x1xf32> to vector<4x8x8xf32>
    %47 = arith.mulf %42, %46 : vector<4x8x8xf32>
    %48 = arith.truncf %47 : vector<4x8x8xf32> to vector<4x8x8xbf16>
    "tpu.trace_start"() <{level = 10 : i32, message = "hqk,hkd->hqd"}> : () -> ()
    %cst_20 = arith.constant dense<0.000000e+00> : vector<4x8x8xf32>
    %49 = tpu.matmul %48, %31, %cst_20 {dimension_numbers = #tpu.dot_dimension_numbers<[2], [1], [1], [2], [0, 0, 0, 1, 1, 2], [0], [0]>} : vector<4x8x8xbf16>, vector<4x8x8xbf16>, vector<4x8x8xf32> -> vector<4x8x8xf32>
    "tpu.trace_stop"() : () -> ()
    %50 = arith.truncf %49 : vector<4x8x8xf32> to vector<4x8x8xbf16>
    %c0_21 = arith.constant 0 : index
    %c0_22 = arith.constant 0 : index
    %c0_23 = arith.constant 0 : index
    %c0_24 = arith.constant 0 : index
    %51 = vector.load %arg6[%c0_21, %c0_22, %c0_23, %c0_24] : memref<1x4x8x32xbf16, #tpu.memory_space<vmem>>, vector<1x4x8x32xbf16>
    %52 = vector.shape_cast %51 : vector<1x4x8x32xbf16> to vector<4x8x32xbf16>
    "tpu.trace_start"() <{level = 10 : i32, message = "htd,hdc->htc"}> : () -> ()
    %cst_25 = arith.constant dense<0.000000e+00> : vector<4x8x32xf32>
    %53 = tpu.matmul %50, %52, %cst_25 {dimension_numbers = #tpu.dot_dimension_numbers<[2], [1], [1], [2], [0, 0, 0, 1, 1, 2], [0], [0]>} : vector<4x8x8xbf16>, vector<4x8x32xbf16>, vector<4x8x32xf32> -> vector<4x8x32xf32>
    "tpu.trace_stop"() : () -> ()
    %cst_26 = arith.constant dense<0.000000e+00> : vector<8x32xf32>
    %54 = vector.multi_reduction <add>, %53, %cst_26 [0] : vector<4x8x32xf32> to vector<8x32xf32>
    %55 = vector.broadcast %6 : vector<1x32xf32> to vector<8x32xf32>
    %56 = arith.addf %54, %55 : vector<8x32xf32>
    %57 = arith.addf %3, %56 : vector<8x32xf32>
    %cst_27 = arith.constant dense<0.000000e+00> : vector<8xf32>
    %58 = vector.multi_reduction <add>, %57, %cst_27 [1] : vector<8x32xf32> to vector<8xf32>
    %59 = vector.shape_cast %58 : vector<8xf32> to vector<8x1xf32>
    %cst_28 = arith.constant 3.200000e+01 : f32
    %60 = vector.broadcast %cst_28 : f32 to vector<8x1xf32>
    %61 = arith.divf %59, %60 : vector<8x1xf32>
    %62 = vector.broadcast %61 : vector<8x1xf32> to vector<8x32xf32>
    %63 = arith.subf %57, %62 : vector<8x32xf32>
    %64 = arith.mulf %63, %63 : vector<8x32xf32>
    %cst_29 = arith.constant dense<0.000000e+00> : vector<8xf32>
    %65 = vector.multi_reduction <add>, %64, %cst_29 [1] : vector<8x32xf32> to vector<8xf32>
    %66 = vector.shape_cast %65 : vector<8xf32> to vector<8x1xf32>
    %cst_30 = arith.constant 3.200000e+01 : f32
    %67 = vector.broadcast %cst_30 : f32 to vector<8x1xf32>
    %68 = arith.divf %66, %67 : vector<8x1xf32>
    %69 = vector.broadcast %61 : vector<8x1xf32> to vector<8x32xf32>
    %70 = arith.subf %57, %69 : vector<8x32xf32>
    %cst_31 = arith.constant 9.99999974E-6 : f32
    %71 = vector.broadcast %cst_31 : f32 to vector<8x1xf32>
    %72 = arith.addf %68, %71 : vector<8x1xf32>
    %73 = math.rsqrt %72 : vector<8x1xf32>
    %74 = vector.broadcast %73 : vector<8x1xf32> to vector<8x32xf32>
    %75 = arith.mulf %70, %74 : vector<8x32xf32>
    %76 = vector.broadcast %7 : vector<1x32xf32> to vector<8x32xf32>
    %77 = arith.mulf %75, %76 : vector<8x32xf32>
    %78 = vector.broadcast %8 : vector<1x32xf32> to vector<8x32xf32>
    %79 = arith.addf %77, %78 : vector<8x32xf32>
    %80 = arith.truncf %79 : vector<8x32xf32> to vector<8x32xbf16>
    %c0_32 = arith.constant 0 : index
    %c0_33 = arith.constant 0 : index
    %c0_34 = arith.constant 0 : index
    %81 = vector.load %arg7[%c0_32, %c0_33, %c0_34] : memref<1x32x64xbf16, #tpu.memory_space<vmem>>, vector<1x32x64xbf16>
    %82 = vector.shape_cast %81 : vector<1x32x64xbf16> to vector<32x64xbf16>
    %cst_35 = arith.constant dense<0.000000e+00> : vector<8x64xf32>
    %83 = tpu.matmul %80, %82, %cst_35 {dimension_numbers = #tpu.dot_dimension_numbers<[1], [0], [0], [1], [0, 0, 1, 1], [], []>} : vector<8x32xbf16>, vector<32x64xbf16>, vector<8x64xf32> -> vector<8x64xf32>
    %84 = vector.broadcast %9 : vector<1x64xf32> to vector<8x64xf32>
    %85 = arith.addf %83, %84 : vector<8x64xf32>
    %cst_36 = arith.constant 0.000000e+00 : f32
    %86 = vector.broadcast %cst_36 : f32 to vector<8x64xf32>
    %87 = arith.maximumf %85, %86 : vector<8x64xf32>
    %88 = arith.truncf %87 : vector<8x64xf32> to vector<8x64xbf16>
    %c0_37 = arith.constant 0 : index
    %c0_38 = arith.constant 0 : index
    %c0_39 = arith.constant 0 : index
    %89 = vector.load %arg8[%c0_37, %c0_38, %c0_39] : memref<1x64x32xbf16, #tpu.memory_space<vmem>>, vector<1x64x32xbf16>
    %90 = vector.shape_cast %89 : vector<1x64x32xbf16> to vector<64x32xbf16>
    %cst_40 = arith.constant dense<0.000000e+00> : vector<8x32xf32>
    %91 = tpu.matmul %88, %90, %cst_40 {dimension_numbers = #tpu.dot_dimension_numbers<[1], [0], [0], [1], [0, 0, 1, 1], [], []>} : vector<8x64xbf16>, vector<64x32xbf16>, vector<8x32xf32> -> vector<8x32xf32>
    %92 = vector.broadcast %10 : vector<1x32xf32> to vector<8x32xf32>
    %93 = arith.addf %91, %92 : vector<8x32xf32>
    %94 = arith.addf %79, %93 : vector<8x32xf32>
    %cst_41 = arith.constant dense<0.000000e+00> : vector<8xf32>
    %95 = vector.multi_reduction <add>, %94, %cst_41 [1] : vector<8x32xf32> to vector<8xf32>
    %96 = vector.shape_cast %95 : vector<8xf32> to vector<8x1xf32>
    %cst_42 = arith.constant 3.200000e+01 : f32
    %97 = vector.broadcast %cst_42 : f32 to vector<8x1xf32>
    %98 = arith.divf %96, %97 : vector<8x1xf32>
    %99 = vector.broadcast %98 : vector<8x1xf32> to vector<8x32xf32>
    %100 = arith.subf %94, %99 : vector<8x32xf32>
    %101 = arith.mulf %100, %100 : vector<8x32xf32>
    %cst_43 = arith.constant dense<0.000000e+00> : vector<8xf32>
    %102 = vector.multi_reduction <add>, %101, %cst_43 [1] : vector<8x32xf32> to vector<8xf32>
    %103 = vector.shape_cast %102 : vector<8xf32> to vector<8x1xf32>
    %cst_44 = arith.constant 3.200000e+01 : f32
    %104 = vector.broadcast %cst_44 : f32 to vector<8x1xf32>
    %105 = arith.divf %103, %104 : vector<8x1xf32>
    %106 = vector.broadcast %98 : vector<8x1xf32> to vector<8x32xf32>
    %107 = arith.subf %94, %106 : vector<8x32xf32>
    %cst_45 = arith.constant 9.99999974E-6 : f32
    %108 = vector.broadcast %cst_45 : f32 to vector<8x1xf32>
    %109 = arith.addf %105, %108 : vector<8x1xf32>
    %110 = math.rsqrt %109 : vector<8x1xf32>
    %111 = vector.broadcast %110 : vector<8x1xf32> to vector<8x32xf32>
    %112 = arith.mulf %107, %111 : vector<8x32xf32>
    %113 = vector.broadcast %11 : vector<1x32xf32> to vector<8x32xf32>
    %114 = arith.mulf %112, %113 : vector<8x32xf32>
    %115 = vector.broadcast %12 : vector<1x32xf32> to vector<8x32xf32>
    %116 = arith.addf %114, %115 : vector<8x32xf32>
    %c0_46 = arith.constant 0 : index
    %c0_47 = arith.constant 0 : index
    %117 = vector.load %arg11[%c0_46, %c0_47] : memref<8x32xf32, #tpu.memory_space<vmem>>, vector<8x32xf32>
    tpu.vector_store %arg11[%c0_46, %c0_47], %116 {strides = array<i32>} : memref<8x32xf32, #tpu.memory_space<vmem>>, vector<8x32xf32>,
    %c0_48 = arith.constant 0 : index
    %c0_49 = arith.constant 0 : index
    %c0_50 = arith.constant 0 : index
    %c0_51 = arith.constant 0 : index
    %118 = vector.load %arg10[%c0_48, %c0_49, %c0_50, %c0_51] : memref<1x1x8x32xf32, #tpu.memory_space<vmem>>, vector<1x1x8x32xf32>
    %119 = vector.shape_cast %118 : vector<1x1x8x32xf32> to vector<8x32xf32>
    %120 = vector.shape_cast %116 : vector<8x32xf32> to vector<1x1x8x32xf32>
    tpu.vector_store %arg10[%c0_48, %c0_49, %c0_50, %c0_51], %120 {strides = array<i32>} : memref<1x1x8x32xf32, #tpu.memory_space<vmem>>, vector<1x1x8x32xf32>,
    return
  }
  func.func @transform_0(%arg0: i32, %arg1: i32) -> (i32, i32, i32) {
    %c0_i32 = arith.constant 0 : i32
    %c0_i32_0 = arith.constant 0 : i32
    %c0_i32_1 = arith.constant 0 : i32
    return %arg0, %c0_i32, %c0_i32_0 : i32, i32, i32
  }
  func.func @transform_1(%arg0: i32, %arg1: i32) -> (i32, i32, i32) {
    %c0_i32 = arith.constant 0 : i32
    %c0_i32_0 = arith.constant 0 : i32
    %c0_i32_1 = arith.constant 0 : i32
    return %arg0, %c0_i32, %c0_i32_0 : i32, i32, i32
  }
  func.func @transform_2(%arg0: i32, %arg1: i32) -> (i32, i32, i32, i32) {
    %c0_i32 = arith.constant 0 : i32
    %c0_i32_0 = arith.constant 0 : i32
    %c0_i32_1 = arith.constant 0 : i32
    %c0_i32_2 = arith.constant 0 : i32
    return %arg1, %c0_i32, %c0_i32_0, %c0_i32_1 : i32, i32, i32, i32
  }
  func.func @transform_3(%arg0: i32, %arg1: i32) -> (i32, i32, i32, i32) {
    %c0_i32 = arith.constant 0 : i32
    %c0_i32_0 = arith.constant 0 : i32
    %c0_i32_1 = arith.constant 0 : i32
    %c0_i32_2 = arith.constant 0 : i32
    return %arg1, %c0_i32, %c0_i32_0, %c0_i32_1 : i32, i32, i32, i32
  }
  func.func @transform_4(%arg0: i32, %arg1: i32) -> (i32, i32, i32, i32) {
    %c0_i32 = arith.constant 0 : i32
    %c0_i32_0 = arith.constant 0 : i32
    %c0_i32_1 = arith.constant 0 : i32
    %c0_i32_2 = arith.constant 0 : i32
    return %arg1, %c0_i32, %c0_i32_0, %c0_i32_1 : i32, i32, i32, i32
  }
  func.func @transform_5(%arg0: i32, %arg1: i32) -> (i32, i32, i32) {
    %c0_i32 = arith.constant 0 : i32
    %c0_i32_0 = arith.constant 0 : i32
    %c0_i32_1 = arith.constant 0 : i32
    return %arg1, %c0_i32, %c0_i32_0 : i32, i32, i32
  }
  func.func @transform_6(%arg0: i32, %arg1: i32) -> (i32, i32, i32) {
    %c0_i32 = arith.constant 0 : i32
    %c0_i32_0 = arith.constant 0 : i32
    %c0_i32_1 = arith.constant 0 : i32
    return %arg1, %c0_i32, %c0_i32_0 : i32, i32, i32
  }
  func.func @transform_7(%arg0: i32, %arg1: i32) -> (i32, i32, i32) {
    %c0_i32 = arith.constant 0 : i32
    %c0_i32_0 = arith.constant 0 : i32
    %c0_i32_1 = arith.constant 0 : i32
    return %arg1, %c0_i32, %c0_i32_0 : i32, i32, i32
  }
  func.func @transform_8(%arg0: i32, %arg1: i32) -> (i32, i32, i32, i32) {
    %c0_i32 = arith.constant 0 : i32
    %c0_i32_0 = arith.constant 0 : i32
    %c0_i32_1 = arith.constant 0 : i32
    return %arg1, %arg0, %c0_i32, %c0_i32_0 : i32, i32, i32, i32
  }
}

</mosaic_0001>

<llo_original>
// kernel: transformer_sentence_encoder_forward.1
$region0: #{transformer_sentence_encoder_forward.1}
  #allocation0 [shape = 'u32[]', space=smem, size = 0x4, offset = 0x4, fixed_abs, tag = 'smem constant byte address 0x4 - core index']
  #allocation1 [shape = 'u32[72,128]{1,0:T(1,128)}', space=vmem, size = 0x9000, scoped, tag = 'internal scratch']
  #allocation2 [shape = 'f32[8,32]{1,0:T(8,128)}', space=vmem, size = 0x1000, scoped, tag = 'scratch operand']
  %s0 = inlined_call_operand.vmem [shape: f32[2,8,32], index: 0, kind: input, shape index: {}]
  %s1 = inlined_call_operand.vmem [shape: f32[2,1,8], index: 1, kind: input, shape index: {}]
  %s2 = inlined_call_operand.vmem [shape: bf16[2,12,32,8], index: 2, kind: input, shape index: {}]
  %s3 = inlined_call_operand.vmem [shape: f32[2,12,1,8], index: 3, kind: input, shape index: {}]
  %s4 = inlined_call_operand.vmem [shape: bf16[2,4,8,32], index: 4, kind: input, shape index: {}]
  %s5 = inlined_call_operand.vmem [shape: bf16[2,32,64], index: 5, kind: input, shape index: {}]
  %s6 = inlined_call_operand.vmem [shape: bf16[2,64,32], index: 6, kind: input, shape index: {}]
  %s7 = inlined_call_operand.vmem [shape: f32[2,8,64], index: 7, kind: input, shape index: {}]
  %s8 = inlined_call_operand.vmem [shape: f32[2,2,8,32], index: 8, kind: output, shape index: {}]
  %s9 = sld [smem:[#allocation0]]
  $region69: #{transformer_sentence_encoder_forward.1} parent=0
    _
  %s11 = ssub.s32 1, %s9
  %s12 = scalar_select 0, %s11, %s9
  loop: start=0, step=1, limit=6
  $region2: #{transformer_sentence_encoder_forward.1} parent=0 // loop_pre_header
    _
  $region3: #{transformer_sentence_encoder_forward.1} parent=0 // loop_header
    %s14 = sphi 0, %s18
    %p15 = scmp.ge.s32.totalorder %s14, 6
    %s21 = sphi 0, %s33
    %s22 = sphi 0, %s29
    %s23 = sphi 0, %s21
    %s24 = sphi 0, %s22
    %s25 = sphi 0, %s23
    %s26 = sphi 0, %s24
    %s36 = sphi 0, %s38
    %s39 = sphi 0, %s36
    %s40 = sphi 0, %s39
    %s56 = sphi 0, %s40
    %s62 = sphi 0, %s64
    %s65 = sphi 0, %s62
    %s66 = sphi 0, %s65
    %s82 = sphi 0, %s66
    %s88 = sphi 0, %s90
    %s91 = sphi 0, %s88
    %s92 = sphi 0, %s91
    %s108 = sphi 0, %s92
    %s114 = sphi 0, %s116
    %s117 = sphi 0, %s114
    %s118 = sphi 0, %s117
    %s134 = sphi 0, %s118
    %s140 = sphi 0, %s142
    %s143 = sphi 0, %s140
    %s144 = sphi 0, %s143
    %s160 = sphi 0, %s144
    %s166 = sphi 0, %s168
    %s169 = sphi 0, %s166
    %s170 = sphi 0, %s169
    %s186 = sphi 0, %s170
    %s192 = sphi 0, %s194
    %s195 = sphi 0, %s192
    %s196 = sphi 0, %s195
    %s212 = sphi 0, %s196
    %s218 = sphi 0, %s220
    %s221 = sphi 0, %s218
    %s222 = sphi 0, %s221
    %s238 = sphi 0, %s222
    %s246 = sphi 0, %s248
    %s249 = sphi 0, %s246
    %s250 = sphi 0, %s249
    %s266 = sphi 0, %s250
  $region4: #{transformer_sentence_encoder_forward.1} parent=0 // loop_header_branch
    %17 = sbr.rel (%p15) target = $region8
  $region5: #{transformer_sentence_encoder_forward.1} parent=0 // loop_body
    %s19 = ssub.s32 %s14, 1
    %s20 = ssub.s32 %s14, 2
    %s27 = sadd.s32 1, %s22
    %p28 = scmp.ge.s32.totalorder %s27, 2
    %s29 = scalar_select %p28, 0, %s27
    %s30 = sadd.s32 1, %s21
    %s31 = scalar_select %p28, %s30, %s21
    %p32 = scmp.ge.s32.totalorder %s31, 2
    %s33 = scalar_select %p32, 0, %s31
    %s34 = ssub.s32 %s21, %s33
    %p35 = scmp.eq.s32.totalorder %s34, 0
    %s37 = sadd.s32 %s36, 1
    %s38 = scalar_select %p35, %s36, %s37
    %p41 = pneg %p35
    %p42 = scmp.eq.s32.totalorder %s14, 3
    %p43 = por %p41, %p42
    %p44 = scmp.ne.s32.totalorder %s36, %s39
    %p45 = scmp.eq.s32.totalorder %s14, 0
    %p46 = por %p44, %p45
    %p47 = scmp.ne.s32.totalorder %s36, %s39
    %p48 = scmp.eq.s32.totalorder %s19, 3
    %p49 = por %p47, %p48
    %p50 = scmp.ne.s32.totalorder %s39, %s40
    %p51 = scmp.eq.s32.totalorder %s19, 0
    %p52 = por %p50, %p51
    %p53 = scmp.ne.s32.totalorder %s39, %s40
    %p54 = scmp.eq.s32.totalorder %s20, 3
    %p55 = por %p53, %p54
    %p57 = scmp.ne.s32.totalorder %s40, %s56
    %p58 = scmp.eq.s32.totalorder %s20, 0
    %p59 = por %p57, %p58
    %s60 = ssub.s32 %s21, %s33
    %p61 = scmp.eq.s32.totalorder %s60, 0
    %s63 = sadd.s32 %s62, 1
    %s64 = scalar_select %p61, %s62, %s63
    %p67 = pneg %p61
    %p68 = scmp.eq.s32.totalorder %s14, 3
    %p69 = por %p67, %p68
    %p70 = scmp.ne.s32.totalorder %s62, %s65
    %p71 = scmp.eq.s32.totalorder %s14, 0
    %p72 = por %p70, %p71
    %p73 = scmp.ne.s32.totalorder %s62, %s65
    %p74 = scmp.eq.s32.totalorder %s19, 3
    %p75 = por %p73, %p74
    %p76 = scmp.ne.s32.totalorder %s65, %s66
    %p77 = scmp.eq.s32.totalorder %s19, 0
    %p78 = por %p76, %p77
    %p79 = scmp.ne.s32.totalorder %s65, %s66
    %p80 = scmp.eq.s32.totalorder %s20, 3
    %p81 = por %p79, %p80
    %p83 = scmp.ne.s32.totalorder %s66, %s82
    %p84 = scmp.eq.s32.totalorder %s20, 0
    %p85 = por %p83, %p84
    %s86 = ssub.s32 %s22, %s29
    %p87 = scmp.eq.s32.totalorder %s86, 0
    %s89 = sadd.s32 %s88, 1
    %s90 = scalar_select %p87, %s88, %s89
    %p93 = pneg %p87
    %p94 = scmp.eq.s32.totalorder %s14, 3
    %p95 = por %p93, %p94
    %p96 = scmp.ne.s32.totalorder %s88, %s91
    %p97 = scmp.eq.s32.totalorder %s14, 0
    %p98 = por %p96, %p97
    %p99 = scmp.ne.s32.totalorder %s88, %s91
    %p100 = scmp.eq.s32.totalorder %s19, 3
    %p101 = por %p99, %p100
    %p102 = scmp.ne.s32.totalorder %s91, %s92
    %p103 = scmp.eq.s32.totalorder %s19, 0
    %p104 = por %p102, %p103
    %p105 = scmp.ne.s32.totalorder %s91, %s92
    %p106 = scmp.eq.s32.totalorder %s20, 3
    %p107 = por %p105, %p106
    %p109 = scmp.ne.s32.totalorder %s92, %s108
    %p110 = scmp.eq.s32.totalorder %s20, 0
    %p111 = por %p109, %p110
    %s112 = ssub.s32 %s22, %s29
    %p113 = scmp.eq.s32.totalorder %s112, 0
    %s115 = sadd.s32 %s114, 1
    %s116 = scalar_select %p113, %s114, %s115
    %p119 = pneg %p113
    %p120 = scmp.eq.s32.totalorder %s14, 3
    %p121 = por %p119, %p120
    %p122 = scmp.ne.s32.totalorder %s114, %s117
    %p123 = scmp.eq.s32.totalorder %s14, 0
    %p124 = por %p122, %p123
    %p125 = scmp.ne.s32.totalorder %s114, %s117
    %p126 = scmp.eq.s32.totalorder %s19, 3
    %p127 = por %p125, %p126
    %p128 = scmp.ne.s32.totalorder %s117, %s118
    %p129 = scmp.eq.s32.totalorder %s19, 0
    %p130 = por %p128, %p129
    %p131 = scmp.ne.s32.totalorder %s117, %s118
    %p132 = scmp.eq.s32.totalorder %s20, 3
    %p133 = por %p131, %p132
    %p135 = scmp.ne.s32.totalorder %s118, %s134
    %p136 = scmp.eq.s32.totalorder %s20, 0
    %p137 = por %p135, %p136
    %s138 = ssub.s32 %s22, %s29
    %p139 = scmp.eq.s32.totalorder %s138, 0
    %s141 = sadd.s32 %s140, 1
    %s142 = scalar_select %p139, %s140, %s141
    %p145 = pneg %p139
    %p146 = scmp.eq.s32.totalorder %s14, 3
    %p147 = por %p145, %p146
    %p148 = scmp.ne.s32.totalorder %s140, %s143
    %p149 = scmp.eq.s32.totalorder %s14, 0
    %p150 = por %p148, %p149
    %p151 = scmp.ne.s32.totalorder %s140, %s143
    %p152 = scmp.eq.s32.totalorder %s19, 3
    %p153 = por %p151, %p152
    %p154 = scmp.ne.s32.totalorder %s143, %s144
    %p155 = scmp.eq.s32.totalorder %s19, 0
    %p156 = por %p154, %p155
    %p157 = scmp.ne.s32.totalorder %s143, %s144
    %p158 = scmp.eq.s32.totalorder %s20, 3
    %p159 = por %p157, %p158
    %p161 = scmp.ne.s32.totalorder %s144, %s160
    %p162 = scmp.eq.s32.totalorder %s20, 0
    %p163 = por %p161, %p162
    %s164 = ssub.s32 %s22, %s29
    %p165 = scmp.eq.s32.totalorder %s164, 0
    %s167 = sadd.s32 %s166, 1
    %s168 = scalar_select %p165, %s166, %s167
    %p171 = pneg %p165
    %p172 = scmp.eq.s32.totalorder %s14, 3
    %p173 = por %p171, %p172
    %p174 = scmp.ne.s32.totalorder %s166, %s169
    %p175 = scmp.eq.s32.totalorder %s14, 0
    %p176 = por %p174, %p175
    %p177 = scmp.ne.s32.totalorder %s166, %s169
    %p178 = scmp.eq.s32.totalorder %s19, 3
    %p179 = por %p177, %p178
    %p180 = scmp.ne.s32.totalorder %s169, %s170
    %p181 = scmp.eq.s32.totalorder %s19, 0
    %p182 = por %p180, %p181
    %p183 = scmp.ne.s32.totalorder %s169, %s170
    %p184 = scmp.eq.s32.totalorder %s20, 3
    %p185 = por %p183, %p184
    %p187 = scmp.ne.s32.totalorder %s170, %s186
    %p188 = scmp.eq.s32.totalorder %s20, 0
    %p189 = por %p187, %p188
    %s190 = ssub.s32 %s22, %s29
    %p191 = scmp.eq.s32.totalorder %s190, 0
    %s193 = sadd.s32 %s192, 1
    %s194 = scalar_select %p191, %s192, %s193
    %p197 = pneg %p191
    %p198 = scmp.eq.s32.totalorder %s14, 3
    %p199 = por %p197, %p198
    %p200 = scmp.ne.s32.totalorder %s192, %s195
    %p201 = scmp.eq.s32.totalorder %s14, 0
    %p202 = por %p200, %p201
    %p203 = scmp.ne.s32.totalorder %s192, %s195
    %p204 = scmp.eq.s32.totalorder %s19, 3
    %p205 = por %p203, %p204
    %p206 = scmp.ne.s32.totalorder %s195, %s196
    %p207 = scmp.eq.s32.totalorder %s19, 0
    %p208 = por %p206, %p207
    %p209 = scmp.ne.s32.totalorder %s195, %s196
    %p210 = scmp.eq.s32.totalorder %s20, 3
    %p211 = por %p209, %p210
    %p213 = scmp.ne.s32.totalorder %s196, %s212
    %p214 = scmp.eq.s32.totalorder %s20, 0
    %p215 = por %p213, %p214
    %s216 = ssub.s32 %s22, %s29
    %p217 = scmp.eq.s32.totalorder %s216, 0
    %s219 = sadd.s32 %s218, 1
    %s220 = scalar_select %p217, %s218, %s219
    %p223 = pneg %p217
    %p224 = scmp.eq.s32.totalorder %s14, 3
    %p225 = por %p223, %p224
    %p226 = scmp.ne.s32.totalorder %s218, %s221
    %p227 = scmp.eq.s32.totalorder %s14, 0
    %p228 = por %p226, %p227
    %p229 = scmp.ne.s32.totalorder %s218, %s221
    %p230 = scmp.eq.s32.totalorder %s19, 3
    %p231 = por %p229, %p230
    %p232 = scmp.ne.s32.totalorder %s221, %s222
    %p233 = scmp.eq.s32.totalorder %s19, 0
    %p234 = por %p232, %p233
    %p235 = scmp.ne.s32.totalorder %s221, %s222
    %p236 = scmp.eq.s32.totalorder %s20, 3
    %p237 = por %p235, %p236
    %p239 = scmp.ne.s32.totalorder %s222, %s238
    %p240 = scmp.eq.s32.totalorder %s20, 0
    %p241 = por %p239, %p240
    %s242 = ssub.s32 %s22, %s29
    %s243 = ssub.s32 %s21, %s33
    %s244 = sor.u32 %s242, %s243
    %p245 = scmp.eq.s32.totalorder %s244, 0
    %s247 = sadd.s32 %s246, 1
    %s248 = scalar_select %p245, %s246, %s247
    %p251 = pneg %p245
    %p252 = scmp.eq.s32.totalorder %s14, 3
    %p253 = por %p251, %p252
    %p254 = scmp.ne.s32.totalorder %s246, %s249
    %p255 = scmp.eq.s32.totalorder %s14, 0
    %p256 = por %p254, %p255
    %p257 = scmp.ne.s32.totalorder %s246, %s249
    %p258 = scmp.eq.s32.totalorder %s19, 3
    %p259 = por %p257, %p258
    %p260 = scmp.ne.s32.totalorder %s249, %s250
    %p261 = scmp.eq.s32.totalorder %s19, 0
    %p262 = por %p260, %p261
    %p263 = scmp.ne.s32.totalorder %s249, %s250
    %p264 = scmp.eq.s32.totalorder %s20, 3
    %p265 = por %p263, %p264
    %p267 = scmp.ne.s32.totalorder %s250, %s266
    %p268 = scmp.eq.s32.totalorder %s20, 0
    %p269 = por %p267, %p268
    %p270 = scmp.le.s32.totalorder 1, %s14
    %p271 = scmp.lt.s32.totalorder %s14, 5
    %p272 = pnand %p270, %p271
    %p273 = pneg %p272
    // Predicated region
    $region9: #{transformer_sentence_encoder_forward.1} parent=5 // pred_check
      _
    $region10: #{transformer_sentence_encoder_forward.1} parent=5 // pred_check_branch
      %275 = sbr.rel (%p272) target = $region12
    $region11: #{transformer_sentence_encoder_forward.1} parent=5 // pred_region
      %s276 = ssub.s32 %s14, 1
    $region12: #{transformer_sentence_encoder_forward.1} parent=5 // pred_fallthru
      _
    %p277 = scmp.lt.s32.totalorder %s14, 4
    // Predicated region
    $region13: #{transformer_sentence_encoder_forward.1} parent=5 // pred_check
      %p278 = pneg %p277
    $region14: #{transformer_sentence_encoder_forward.1} parent=5 // pred_check_branch
      %280 = sbr.rel (%p278) target = $region16
    $region15: #{transformer_sentence_encoder_forward.1} parent=5 // pred_region
      // Predicated region
      $region17: #{transformer_sentence_encoder_forward.1} parent=15 // pred_check
        %p281 = pneg %p46
      $region18: #{transformer_sentence_encoder_forward.1} parent=15 // pred_check_branch
        %283 = sbr.rel (%p281) target = $region20
      $region19: #{transformer_sentence_encoder_forward.1} parent=15 // pred_region
        %p284 = scmp.lt.s32.totalorder %s21, 1
        %s285 = scalar_select %p284, %s21, 1
        %s286 = smul.addr %s285, 8
        %s287 = scalar_lea.vmem %s0, %s286
      $region20: #{transformer_sentence_encoder_forward.1} parent=15 // pred_fallthru
        _
      // Predicated region
      $region21: #{transformer_sentence_encoder_forward.1} parent=15 // pred_check
        %p288 = pneg %p72
      $region22: #{transformer_sentence_encoder_forward.1} parent=15 // pred_check_branch
        %290 = sbr.rel (%p288) target = $region24
      $region23: #{transformer_sentence_encoder_forward.1} parent=15 // pred_region
        %p291 = scmp.lt.s32.totalorder %s21, 1
        %s292 = scalar_select %p291, %s21, 1
        %s293 = scalar_lea.vmem %s1, %s292
      $region24: #{transformer_sentence_encoder_forward.1} parent=15 // pred_fallthru
        _
      // Predicated region
      $region25: #{transformer_sentence_encoder_forward.1} parent=15 // pred_check
        %p294 = pneg %p98
      $region26: #{transformer_sentence_encoder_forward.1} parent=15 // pred_check_branch
        %296 = sbr.rel (%p294) target = $region28
      $region27: #{transformer_sentence_encoder_forward.1} parent=15 // pred_region
        %p297 = scmp.lt.s32.totalorder %s22, 1
        %s298 = scalar_select %p297, %s22, 1
        %s299 = smul.addr %s298, 48
        %s300 = smul.addr %s299, 4
        %s301 = scalar_lea.vmem %s2, %s300
      $region28: #{transformer_sentence_encoder_forward.1} parent=15 // pred_fallthru
        _
      // Predicated region
      $region29: #{transformer_sentence_encoder_forward.1} parent=15 // pred_check
        %p302 = pneg %p124
      $region30: #{transformer_sentence_encoder_forward.1} parent=15 // pred_check_branch
        %304 = sbr.rel (%p302) target = $region32
      $region31: #{transformer_sentence_encoder_forward.1} parent=15 // pred_region
        %p305 = scmp.lt.s32.totalorder %s22, 1
        %s306 = scalar_select %p305, %s22, 1
        %s307 = smul.addr %s306, 12
        %s308 = scalar_lea.vmem %s3, %s307
      $region32: #{transformer_sentence_encoder_forward.1} parent=15 // pred_fallthru
        _
      // Predicated region
      $region33: #{transformer_sentence_encoder_forward.1} parent=15 // pred_check
        %p309 = pneg %p150
      $region34: #{transformer_sentence_encoder_forward.1} parent=15 // pred_check_branch
        %311 = sbr.rel (%p309) target = $region36
      $region35: #{transformer_sentence_encoder_forward.1} parent=15 // pred_region
        %p312 = scmp.lt.s32.totalorder %s22, 1
        %s313 = scalar_select %p312, %s22, 1
        %s314 = smul.addr %s313, 4
        %s315 = smul.addr %s314, 4
        %s316 = scalar_lea.vmem %s4, %s315
      $region36: #{transformer_sentence_encoder_forward.1} parent=15 // pred_fallthru
        _
      // Predicated region
      $region37: #{transformer_sentence_encoder_forward.1} parent=15 // pred_check
        %p317 = pneg %p176
      $region38: #{transformer_sentence_encoder_forward.1} parent=15 // pred_check_branch
        %319 = sbr.rel (%p317) target = $region40
      $region39: #{transformer_sentence_encoder_forward.1} parent=15 // pred_region
        %p320 = scmp.lt.s32.totalorder %s22, 1
        %s321 = scalar_select %p320, %s22, 1
        %s322 = smul.addr %s321, 4
        %s323 = smul.addr %s322, 4
        %s324 = scalar_lea.vmem %s5, %s323
      $region40: #{transformer_sentence_encoder_forward.1} parent=15 // pred_fallthru
        _
      // Predicated region
      $region41: #{transformer_sentence_encoder_forward.1} parent=15 // pred_check
        %p325 = pneg %p202
      $region42: #{transformer_sentence_encoder_forward.1} parent=15 // pred_check_branch
        %327 = sbr.rel (%p325) target = $region44
      $region43: #{transformer_sentence_encoder_forward.1} parent=15 // pred_region
        %p328 = scmp.lt.s32.totalorder %s22, 1
        %s329 = scalar_select %p328, %s22, 1
        %s330 = smul.addr %s329, 8
        %s331 = smul.addr %s330, 4
        %s332 = scalar_lea.vmem %s6, %s331
      $region44: #{transformer_sentence_encoder_forward.1} parent=15 // pred_fallthru
        _
      // Predicated region
      $region45: #{transformer_sentence_encoder_forward.1} parent=15 // pred_check
        %p333 = pneg %p228
      $region46: #{transformer_sentence_encoder_forward.1} parent=15 // pred_check_branch
        %335 = sbr.rel (%p333) target = $region48
      $region47: #{transformer_sentence_encoder_forward.1} parent=15 // pred_region
        %p336 = scmp.lt.s32.totalorder %s22, 1
        %s337 = scalar_select %p336, %s22, 1
        %s338 = smul.addr %s337, 8
        %s339 = scalar_lea.vmem %s7, %s338
      $region48: #{transformer_sentence_encoder_forward.1} parent=15 // pred_fallthru
        _
    $region16: #{transformer_sentence_encoder_forward.1} parent=5 // pred_fallthru
      _
    %p340 = scmp.le.s32.totalorder 1, %s14
    %p341 = scmp.lt.s32.totalorder %s14, 5
    %p342 = pnand %p340, %p341
    %p343 = pneg %p342
    // Predicated region
    $region49: #{transformer_sentence_encoder_forward.1} parent=5 // pred_check
      _
    $region50: #{transformer_sentence_encoder_forward.1} parent=5 // pred_check_branch
      %345 = sbr.rel (%p342) target = $region52
    $region51: #{transformer_sentence_encoder_forward.1} parent=5 // pred_region
      %s346 = ssub.s32 %s14, 1
      %p347 = scmp.lt.s32.totalorder %s23, 1
      %s348 = scalar_select %p347, %s23, 1
      %s349 = smul.addr %s348, 8
      %s350 = scalar_lea.vmem %s0, %s349
      %p351 = pneg %p52
      %p352 = pneg %p49
      %p353 = scmp.lt.s32.totalorder %s23, 1
      %s354 = scalar_select %p353, %s23, 1
      %s355 = scalar_lea.vmem %s1, %s354
      %p356 = pneg %p78
      %p357 = pneg %p75
      %p358 = scmp.lt.s32.totalorder %s24, 1
      %s359 = scalar_select %p358, %s24, 1
      %s360 = smul.addr %s359, 48
      %s361 = smul.addr %s360, 4
      %s362 = scalar_lea.vmem %s2, %s361
      %p363 = pneg %p104
      %p364 = pneg %p101
      %p365 = scmp.lt.s32.totalorder %s24, 1
      %s366 = scalar_select %p365, %s24, 1
      %s367 = smul.addr %s366, 12
      %s368 = scalar_lea.vmem %s3, %s367
      %p369 = pneg %p130
      %p370 = pneg %p127
      %p371 = scmp.lt.s32.totalorder %s24, 1
      %s372 = scalar_select %p371, %s24, 1
      %s373 = smul.addr %s372, 4
      %s374 = smul.addr %s373, 4
      %s375 = scalar_lea.vmem %s4, %s374
      %p376 = pneg %p156
      %p377 = pneg %p153
      %p378 = scmp.lt.s32.totalorder %s24, 1
      %s379 = scalar_select %p378, %s24, 1
      %s380 = smul.addr %s379, 4
      %s381 = smul.addr %s380, 4
      %s382 = scalar_lea.vmem %s5, %s381
      %p383 = pneg %p182
      %p384 = pneg %p179
      %p385 = scmp.lt.s32.totalorder %s24, 1
      %s386 = scalar_select %p385, %s24, 1
      %s387 = smul.addr %s386, 8
      %s388 = smul.addr %s387, 4
      %s389 = scalar_lea.vmem %s6, %s388
      %p390 = pneg %p208
      %p391 = pneg %p205
      %p392 = scmp.lt.s32.totalorder %s24, 1
      %s393 = scalar_select %p392, %s24, 1
      %s394 = smul.addr %s393, 8
      %s395 = scalar_lea.vmem %s7, %s394
      %p396 = pneg %p234
      %p397 = pneg %p231
      %p398 = pneg %p262
      %p399 = pneg %p259
      %p400 = scmp.lt.s32.totalorder %s24, 1
      %s401 = scalar_select %p400, %s24, 1
      %p402 = scmp.lt.s32.totalorder %s23, 1
      %s403 = scalar_select %p402, %s23, 1
      %s404 = smul.addr %s401, 2
      %s405 = sadd.s32 %s403, %s404
      %s406 = smul.addr %s405, 8
      %s407 = scalar_lea.vmem %s8, %s406
      %p408 = scmp.lt.s32.totalorder %s23, 1
      %s409 = scalar_select %p408, %s23, 1
      %s410 = smul.addr %s409, 8
      %s411 = scalar_lea.vmem %s0, %s410
      %p412 = scmp.lt.s32.totalorder %s23, 1
      %s413 = scalar_select %p412, %s23, 1
      %s414 = scalar_lea.vmem %s1, %s413
      %p415 = scmp.lt.s32.totalorder %s24, 1
      %s416 = scalar_select %p415, %s24, 1
      %s417 = smul.addr %s416, 48
      %s418 = smul.addr %s417, 4
      %s419 = scalar_lea.vmem %s2, %s418
      %p420 = scmp.lt.s32.totalorder %s24, 1
      %s421 = scalar_select %p420, %s24, 1
      %s422 = smul.addr %s421, 12
      %s423 = scalar_lea.vmem %s3, %s422
      %p424 = scmp.lt.s32.totalorder %s24, 1
      %s425 = scalar_select %p424, %s24, 1
      %s426 = smul.addr %s425, 4
      %s427 = smul.addr %s426, 4
      %s428 = scalar_lea.vmem %s4, %s427
      %p429 = scmp.lt.s32.totalorder %s24, 1
      %s430 = scalar_select %p429, %s24, 1
      %s431 = smul.addr %s430, 4
      %s432 = smul.addr %s431, 4
      %s433 = scalar_lea.vmem %s5, %s432
      %p434 = scmp.lt.s32.totalorder %s24, 1
      %s435 = scalar_select %p434, %s24, 1
      %s436 = smul.addr %s435, 8
      %s437 = smul.addr %s436, 4
      %s438 = scalar_lea.vmem %s6, %s437
      %p439 = scmp.lt.s32.totalorder %s24, 1
      %s440 = scalar_select %p439, %s24, 1
      %s441 = smul.addr %s440, 8
      %s442 = scalar_lea.vmem %s7, %s441
      %p443 = scmp.lt.s32.totalorder %s24, 1
      %s444 = scalar_select %p443, %s24, 1
      %p445 = scmp.lt.s32.totalorder %s23, 1
      %s446 = scalar_select %p445, %s23, 1
      %s447 = smul.addr %s444, 2
      %s448 = sadd.s32 %s446, %s447
      %s449 = smul.addr %s448, 8
      %s450 = scalar_lea.vmem %s8, %s449
      %p452 = scmp.eq.s32.totalorder %s24, 0
      // Predicated region
      $region53: #{transformer_sentence_encoder_forward.1} parent=51 // pred_check
        %p453 = pneg %p452
      $region54: #{transformer_sentence_encoder_forward.1} parent=51 // pred_check_branch
        %455 = sbr.rel (%p453) target = $region56
      $region55: #{transformer_sentence_encoder_forward.1} parent=51 // pred_region
        %v456 = vld [vmem:[%s411] sm:$0xff]
        %vm457 = vcmask 261120
        %458 = vst.msk [vmem:[#allocation2] sm:$0xff] %vm457, %v456
      $region56: #{transformer_sentence_encoder_forward.1} parent=51 // pred_fallthru
        _
      %v459 = vld [vmem:[#allocation2] sm:$0xff]
      %v460 = vld [vmem:[%s442] sm:$0xff]
      %v461 = vpack.c.bf16 %v459, %v459
      %v462 = vld [vmem:[%s419] sm:$0xf]
      %v463 = vld [vmem:[%s419 + $0x4] sm:$0xf]
      %v464 = vld [vmem:[%s419 + $0x8] sm:$0xf]
      %v465 = vld [vmem:[%s419 + $0xc] sm:$0xf]
      %v466 = vld [vmem:[%s419 + $0x10] sm:$0xf]
      %v467 = vld [vmem:[%s419 + $0x14] sm:$0xf]
      %v468 = vld [vmem:[%s419 + $0x18] sm:$0xf]
      %v469 = vld [vmem:[%s419 + $0x1c] sm:$0xf]
      %v470 = vld [vmem:[%s419 + $0x20] sm:$0xf]
      %v471 = vld [vmem:[%s419 + $0x24] sm:$0xf]
      %v472 = vld [vmem:[%s419 + $0x28] sm:$0xf]
      %v473 = vld [vmem:[%s419 + $0x2c] sm:$0xf]
      %v474 = vld [vmem:[%s419 + $0x30] sm:$0xf]
      %v475 = vld [vmem:[%s419 + $0x34] sm:$0xf]
      %v476 = vld [vmem:[%s419 + $0x38] sm:$0xf]
      %v477 = vld [vmem:[%s419 + $0x3c] sm:$0xf]
      %v478 = vld [vmem:[%s419 + $0x40] sm:$0xf]
      %v479 = vld [vmem:[%s419 + $0x44] sm:$0xf]
      %v480 = vld [vmem:[%s419 + $0x48] sm:$0xf]
      %v481 = vld [vmem:[%s419 + $0x4c] sm:$0xf]
      %v482 = vld [vmem:[%s419 + $0x50] sm:$0xf]
      %v483 = vld [vmem:[%s419 + $0x54] sm:$0xf]
      %v484 = vld [vmem:[%s419 + $0x58] sm:$0xf]
      %v485 = vld [vmem:[%s419 + $0x5c] sm:$0xf]
      %v486 = vld [vmem:[%s419 + $0x60] sm:$0xf]
      %v487 = vld [vmem:[%s419 + $0x64] sm:$0xf]
      %v488 = vld [vmem:[%s419 + $0x68] sm:$0xf]
      %v489 = vld [vmem:[%s419 + $0x6c] sm:$0xf]
      %v490 = vld [vmem:[%s419 + $0x70] sm:$0xf]
      %v491 = vld [vmem:[%s419 + $0x74] sm:$0xf]
      %v492 = vld [vmem:[%s419 + $0x78] sm:$0xf]
      %v493 = vld [vmem:[%s419 + $0x7c] sm:$0xf]
      %v494 = vld [vmem:[%s419 + $0x80] sm:$0xf]
      %v495 = vld [vmem:[%s419 + $0x84] sm:$0xf]
      %v496 = vld [vmem:[%s419 + $0x88] sm:$0xf]
      %v497 = vld [vmem:[%s419 + $0x8c] sm:$0xf]
      %v498 = vld [vmem:[%s419 + $0x90] sm:$0xf]
      %v499 = vld [vmem:[%s419 + $0x94] sm:$0xf]
      %v500 = vld [vmem:[%s419 + $0x98] sm:$0xf]
      %v501 = vld [vmem:[%s419 + $0x9c] sm:$0xf]
      %v502 = vld [vmem:[%s419 + $0xa0] sm:$0xf]
      %v503 = vld [vmem:[%s419 + $0xa4] sm:$0xf]
      %v504 = vld [vmem:[%s419 + $0xa8] sm:$0xf]
      %v505 = vld [vmem:[%s419 + $0xac] sm:$0xf]
      %v506 = vld [vmem:[%s419 + $0xb0] sm:$0xf]
      %v507 = vld [vmem:[%s419 + $0xb4] sm:$0xf]
      %v508 = vld [vmem:[%s419 + $0xb8] sm:$0xf]
      %v509 = vld [vmem:[%s419 + $0xbc] sm:$0xf]
      %v510 = vld [vmem:[%s423] sm:$0x1]
      %v511 = vld [vmem:[%s423 + $0x1] sm:$0x1]
      %v512 = vld [vmem:[%s423 + $0x2] sm:$0x1]
      %v513 = vld [vmem:[%s423 + $0x3] sm:$0x1]
      %v514 = vld [vmem:[%s423 + $0x4] sm:$0x1]
      %v515 = vld [vmem:[%s423 + $0x5] sm:$0x1]
      %v516 = vld [vmem:[%s423 + $0x6] sm:$0x1]
      %v517 = vld [vmem:[%s423 + $0x7] sm:$0x1]
      %v518 = vld [vmem:[%s423 + $0x8] sm:$0x1]
      %v519 = vld [vmem:[%s423 + $0x9] sm:$0x1]
      %v520 = vld [vmem:[%s423 + $0xa] sm:$0x1]
      %v521 = vld [vmem:[%s423 + $0xb] sm:$0x1]
      %v534 = vperm.slane %v510, 0
      %v535 = vperm.slane %v511, 0
      %v536 = vperm.slane %v512, 0
      %v537 = vperm.slane %v513, 0
      %v538 = vperm.slane %v514, 0
      %v539 = vperm.slane %v515, 0
      %v540 = vperm.slane %v516, 0
      %v541 = vperm.slane %v517, 0
      %v542 = vperm.slane %v518, 0
      %v543 = vperm.slane %v519, 0
      %v544 = vperm.slane %v520, 0
      %v545 = vperm.slane %v521, 0
      %v562 = vunpack.c.l.b16 %v462
      %v563 = vunpack.c.l.b16 %v463
      %v564 = vunpack.c.l.b16 %v464
      %v565 = vunpack.c.l.b16 %v465
      %v566 = vpack.c.b16 %v563, %v562
      %v567 = vpack.c.b16 %v565, %v564
      %vm570 = vcmask 261120
      %v572 = vsel %vm570, %v461, 0
      %574 = vmatpush.bf16.msra.mxu0 0
      %575 = vmatpush.bf16.msra.mxu0 0
      %576 = vmatpush.bf16.msra.mxu0 0
      %577 = vmatpush.bf16.msra.mxu0 0
      %578 = vmatpush.bf16.msra.mxu0 0
      %579 = vmatpush.bf16.msra.mxu0 0
      %580 = vmatpush.bf16.msra.mxu0 %v567
      %581 = vmatpush.bf16.msra.mxu0 %v566
      %582 = vmatmul.bf16.gmra.mxu0 %v572
      %v583 = vpop.f32.mrf.mxu0
      %v584 = vadd.f32 %v534, %v583
      %v585 = vpop.f32.mrf.mxu0
      %586 = vdwg.mxu0
      %v591 = vunpack.c.l.b16 %v466
      %v592 = vunpack.c.l.b16 %v467
      %v593 = vunpack.c.l.b16 %v468
      %v594 = vunpack.c.l.b16 %v469
      %v595 = vpack.c.b16 %v592, %v591
      %v596 = vpack.c.b16 %v594, %v593
      %599 = vmatpush.bf16.msra.mxu0 0
      %600 = vmatpush.bf16.msra.mxu0 0
      %601 = vmatpush.bf16.msra.mxu0 0
      %602 = vmatpush.bf16.msra.mxu0 0
      %603 = vmatpush.bf16.msra.mxu0 0
      %604 = vmatpush.bf16.msra.mxu0 0
      %605 = vmatpush.bf16.msra.mxu0 %v596
      %606 = vmatpush.bf16.msra.mxu0 %v595
      %607 = vmatmul.bf16.gmra.mxu0 %v572
      %v608 = vpop.f32.mrf.mxu0
      %v609 = vadd.f32 %v535, %v608
      %v610 = vpop.f32.mrf.mxu0
      %611 = vdwg.mxu0
      %v616 = vunpack.c.l.b16 %v470
      %v617 = vunpack.c.l.b16 %v471
      %v618 = vunpack.c.l.b16 %v472
      %v619 = vunpack.c.l.b16 %v473
      %v620 = vpack.c.b16 %v617, %v616
      %v621 = vpack.c.b16 %v619, %v618
      %624 = vmatpush.bf16.msra.mxu0 0
      %625 = vmatpush.bf16.msra.mxu0 0
      %626 = vmatpush.bf16.msra.mxu0 0
      %627 = vmatpush.bf16.msra.mxu0 0
      %628 = vmatpush.bf16.msra.mxu0 0
      %629 = vmatpush.bf16.msra.mxu0 0
      %630 = vmatpush.bf16.msra.mxu0 %v621
      %631 = vmatpush.bf16.msra.mxu0 %v620
      %632 = vmatmul.bf16.gmra.mxu0 %v572
      %v633 = vpop.f32.mrf.mxu0
      %v634 = vadd.f32 %v536, %v633
      %v635 = vpop.f32.mrf.mxu0
      %636 = vdwg.mxu0
      %v641 = vunpack.c.l.b16 %v474
      %v642 = vunpack.c.l.b16 %v475
      %v643 = vunpack.c.l.b16 %v476
      %v644 = vunpack.c.l.b16 %v477
      %v645 = vpack.c.b16 %v642, %v641
      %v646 = vpack.c.b16 %v644, %v643
      %649 = vmatpush.bf16.msra.mxu0 0
      %650 = vmatpush.bf16.msra.mxu0 0
      %651 = vmatpush.bf16.msra.mxu0 0
      %652 = vmatpush.bf16.msra.mxu0 0
      %653 = vmatpush.bf16.msra.mxu0 0
      %654 = vmatpush.bf16.msra.mxu0 0
      %655 = vmatpush.bf16.msra.mxu0 %v646
      %656 = vmatpush.bf16.msra.mxu0 %v645
      %657 = vmatmul.bf16.gmra.mxu0 %v572
      %v658 = vpop.f32.mrf.mxu0
      %v659 = vadd.f32 %v537, %v658
      %v660 = vpop.f32.mrf.mxu0
      %661 = vdwg.mxu0
      %v666 = vunpack.c.l.b16 %v478
      %v667 = vunpack.c.l.b16 %v479
      %v668 = vunpack.c.l.b16 %v480
      %v669 = vunpack.c.l.b16 %v481
      %v670 = vpack.c.b16 %v667, %v666
      %v671 = vpack.c.b16 %v669, %v668
      %674 = vmatpush.bf16.msra.mxu0 0
      %675 = vmatpush.bf16.msra.mxu0 0
      %676 = vmatpush.bf16.msra.mxu0 0
      %677 = vmatpush.bf16.msra.mxu0 0
      %678 = vmatpush.bf16.msra.mxu0 0
      %679 = vmatpush.bf16.msra.mxu0 0
      %680 = vmatpush.bf16.msra.mxu0 %v671
      %681 = vmatpush.bf16.msra.mxu0 %v670
      %682 = vmatmul.bf16.gmra.mxu0 %v572
      %v683 = vpop.f32.mrf.mxu0
      %v684 = vadd.f32 %v538, %v683
      %v685 = vpop.f32.mrf.mxu0
      %686 = vdwg.mxu0
      %v691 = vunpack.c.l.b16 %v482
      %v692 = vunpack.c.l.b16 %v483
      %v693 = vunpack.c.l.b16 %v484
      %v694 = vunpack.c.l.b16 %v485
      %v695 = vpack.c.b16 %v692, %v691
      %v696 = vpack.c.b16 %v694, %v693
      %699 = vmatpush.bf16.msra.mxu0 0
      %700 = vmatpush.bf16.msra.mxu0 0
      %701 = vmatpush.bf16.msra.mxu0 0
      %702 = vmatpush.bf16.msra.mxu0 0
      %703 = vmatpush.bf16.msra.mxu0 0
      %704 = vmatpush.bf16.msra.mxu0 0
      %705 = vmatpush.bf16.msra.mxu0 %v696
      %706 = vmatpush.bf16.msra.mxu0 %v695
      %707 = vmatmul.bf16.gmra.mxu0 %v572
      %v708 = vpop.f32.mrf.mxu0
      %v709 = vadd.f32 %v539, %v708
      %v710 = vpop.f32.mrf.mxu0
      %711 = vdwg.mxu0
      %v716 = vunpack.c.l.b16 %v486
      %v717 = vunpack.c.l.b16 %v487
      %v718 = vunpack.c.l.b16 %v488
      %v719 = vunpack.c.l.b16 %v489
      %v720 = vpack.c.b16 %v717, %v716
      %v721 = vpack.c.b16 %v719, %v718
      %724 = vmatpush.bf16.msra.mxu0 0
      %725 = vmatpush.bf16.msra.mxu0 0
      %726 = vmatpush.bf16.msra.mxu0 0
      %727 = vmatpush.bf16.msra.mxu0 0
      %728 = vmatpush.bf16.msra.mxu0 0
      %729 = vmatpush.bf16.msra.mxu0 0
      %730 = vmatpush.bf16.msra.mxu0 %v721
      %731 = vmatpush.bf16.msra.mxu0 %v720
      %732 = vmatmul.bf16.gmra.mxu0 %v572
      %v733 = vpop.f32.mrf.mxu0
      %v734 = vadd.f32 %v540, %v733
      %v735 = vpop.f32.mrf.mxu0
      %736 = vdwg.mxu0
      %v741 = vunpack.c.l.b16 %v490
      %v742 = vunpack.c.l.b16 %v491
      %v743 = vunpack.c.l.b16 %v492
      %v744 = vunpack.c.l.b16 %v493
      %v745 = vpack.c.b16 %v742, %v741
      %v746 = vpack.c.b16 %v744, %v743
      %749 = vmatpush.bf16.msra.mxu0 0
      %750 = vmatpush.bf16.msra.mxu0 0
      %751 = vmatpush.bf16.msra.mxu0 0
      %752 = vmatpush.bf16.msra.mxu0 0
      %753 = vmatpush.bf16.msra.mxu0 0
      %754 = vmatpush.bf16.msra.mxu0 0
      %755 = vmatpush.bf16.msra.mxu0 %v746
      %756 = vmatpush.bf16.msra.mxu0 %v745
      %757 = vmatmul.bf16.gmra.mxu0 %v572
      %v758 = vpop.f32.mrf.mxu0
      %v759 = vadd.f32 %v541, %v758
      %v760 = vpop.f32.mrf.mxu0
      %761 = vdwg.mxu0
      %v766 = vunpack.c.l.b16 %v494
      %v767 = vunpack.c.l.b16 %v495
      %v768 = vunpack.c.l.b16 %v496
      %v769 = vunpack.c.l.b16 %v497
      %v770 = vpack.c.b16 %v767, %v766
      %v771 = vpack.c.b16 %v769, %v768
      %774 = vmatpush.bf16.msra.mxu0 0
      %775 = vmatpush.bf16.msra.mxu0 0
      %776 = vmatpush.bf16.msra.mxu0 0
      %777 = vmatpush.bf16.msra.mxu0 0
      %778 = vmatpush.bf16.msra.mxu0 0
      %779 = vmatpush.bf16.msra.mxu0 0
      %780 = vmatpush.bf16.msra.mxu0 %v771
      %781 = vmatpush.bf16.msra.mxu0 %v770
      %782 = vmatmul.bf16.gmra.mxu0 %v572
      %v783 = vpop.f32.mrf.mxu0
      %v784 = vadd.f32 %v542, %v783
      %v785 = vpop.f32.mrf.mxu0
      %786 = vdwg.mxu0
      %v791 = vunpack.c.l.b16 %v498
      %v792 = vunpack.c.l.b16 %v499
      %v793 = vunpack.c.l.b16 %v500
      %v794 = vunpack.c.l.b16 %v501
      %v795 = vpack.c.b16 %v792, %v791
      %v796 = vpack.c.b16 %v794, %v793
      %799 = vmatpush.bf16.msra.mxu0 0
      %800 = vmatpush.bf16.msra.mxu0 0
      %801 = vmatpush.bf16.msra.mxu0 0
      %802 = vmatpush.bf16.msra.mxu0 0
      %803 = vmatpush.bf16.msra.mxu0 0
      %804 = vmatpush.bf16.msra.mxu0 0
      %805 = vmatpush.bf16.msra.mxu0 %v796
      %806 = vmatpush.bf16.msra.mxu0 %v795
      %807 = vmatmul.bf16.gmra.mxu0 %v572
      %v808 = vpop.f32.mrf.mxu0
      %v809 = vadd.f32 %v543, %v808
      %v810 = vpop.f32.mrf.mxu0
      %811 = vdwg.mxu0
      %v816 = vunpack.c.l.b16 %v502
      %v817 = vunpack.c.l.b16 %v503
      %v818 = vunpack.c.l.b16 %v504
      %v819 = vunpack.c.l.b16 %v505
      %v820 = vpack.c.b16 %v817, %v816
      %v821 = vpack.c.b16 %v819, %v818
      %824 = vmatpush.bf16.msra.mxu0 0
      %825 = vmatpush.bf16.msra.mxu0 0
      %826 = vmatpush.bf16.msra.mxu0 0
      %827 = vmatpush.bf16.msra.mxu0 0
      %828 = vmatpush.bf16.msra.mxu0 0
      %829 = vmatpush.bf16.msra.mxu0 0
      %830 = vmatpush.bf16.msra.mxu0 %v821
      %831 = vmatpush.bf16.msra.mxu0 %v820
      %832 = vmatmul.bf16.gmra.mxu0 %v572
      %v833 = vpop.f32.mrf.mxu0
      %v834 = vadd.f32 %v544, %v833
      %v835 = vpop.f32.mrf.mxu0
      %836 = vdwg.mxu0
      %v841 = vunpack.c.l.b16 %v506
      %v842 = vunpack.c.l.b16 %v507
      %v843 = vunpack.c.l.b16 %v508
      %v844 = vunpack.c.l.b16 %v509
      %v845 = vpack.c.b16 %v842, %v841
      %v846 = vpack.c.b16 %v844, %v843
      %849 = vmatpush.bf16.msra.mxu0 0
      %850 = vmatpush.bf16.msra.mxu0 0
      %851 = vmatpush.bf16.msra.mxu0 0
      %852 = vmatpush.bf16.msra.mxu0 0
      %853 = vmatpush.bf16.msra.mxu0 0
      %854 = vmatpush.bf16.msra.mxu0 0
      %855 = vmatpush.bf16.msra.mxu0 %v846
      %856 = vmatpush.bf16.msra.mxu0 %v845
      %857 = vmatmul.bf16.gmra.mxu0 %v572
      %v858 = vpop.f32.mrf.mxu0
      %v859 = vadd.f32 %v545, %v858
      %v860 = vpop.f32.mrf.mxu0
      %861 = vdwg.mxu0
      %v862 = vmul.f32 %v584, 0.35355338
      %v863 = vmul.f32 %v609, 0.35355338
      %v864 = vmul.f32 %v634, 0.35355338
      %v865 = vmul.f32 %v659, 0.35355338
      %v866 = vpack.c.bf16 %v862, %v862
      %v867 = vpack.c.bf16 %v863, %v863
      %v868 = vpack.c.bf16 %v864, %v864
      %v869 = vpack.c.bf16 %v865, %v865
      %v870 = vpack.c.bf16 %v684, %v684
      %v871 = vpack.c.bf16 %v709, %v709
      %v872 = vpack.c.bf16 %v734, %v734
      %v873 = vpack.c.bf16 %v759, %v759
      %v874 = vpack.c.bf16 %v784, %v784
      %v875 = vpack.c.bf16 %v809, %v809
      %v876 = vpack.c.bf16 %v834, %v834
      %v877 = vpack.c.bf16 %v859, %v859
      %v878 = vld [vmem:[%s414] sm:$0x1]
      %v880 = vperm.slane %v878, 0
      %vm882 = vcmask 64512
      %v884 = vsel %vm882, %v866, 0
      %v887 = vsel %vm882, %v870, 0
      %889 = vmatpush.bf16.xpose.msra.mxu0 0
      %890 = vmatpush.bf16.xpose.msra.mxu0 0
      %891 = vmatpush.bf16.xpose.msra.mxu0 0
      %892 = vmatpush.bf16.xpose.msra.mxu0 0
      %893 = vmatpush.bf16.xpose.msra.mxu0 0
      %894 = vmatpush.bf16.xpose.msra.mxu0 0
      %895 = vmatpush.bf16.xpose.msra.mxu0 0
      %896 = vmatpush.bf16.xpose.msra.mxu0 %v887
      %897 = vmatmul.bf16.gmra.mxu0 %v884
      %v898 = vpop.f32.mrf.mxu0
      %v899 = vadd.f32 %v880, %v898
      %v900 = vpop.f32.mrf.mxu0
      %901 = vdwg.mxu0
      %v903 = vsel %vm882, %v867, 0
      %v906 = vsel %vm882, %v871, 0
      %908 = vmatpush.bf16.xpose.msra.mxu0 0
      %909 = vmatpush.bf16.xpose.msra.mxu0 0
      %910 = vmatpush.bf16.xpose.msra.mxu0 0
      %911 = vmatpush.bf16.xpose.msra.mxu0 0
      %912 = vmatpush.bf16.xpose.msra.mxu0 0
      %913 = vmatpush.bf16.xpose.msra.mxu0 0
      %914 = vmatpush.bf16.xpose.msra.mxu0 0
      %915 = vmatpush.bf16.xpose.msra.mxu0 %v906
      %916 = vmatmul.bf16.gmra.mxu0 %v903
      %v917 = vpop.f32.mrf.mxu0
      %v918 = vadd.f32 %v880, %v917
      %v919 = vpop.f32.mrf.mxu0
      %920 = vdwg.mxu0
      %v922 = vsel %vm882, %v868, 0
      %v925 = vsel %vm882, %v872, 0
      %927 = vmatpush.bf16.xpose.msra.mxu0 0
      %928 = vmatpush.bf16.xpose.msra.mxu0 0
      %929 = vmatpush.bf16.xpose.msra.mxu0 0
      %930 = vmatpush.bf16.xpose.msra.mxu0 0
      %931 = vmatpush.bf16.xpose.msra.mxu0 0
      %932 = vmatpush.bf16.xpose.msra.mxu0 0
      %933 = vmatpush.bf16.xpose.msra.mxu0 0
      %934 = vmatpush.bf16.xpose.msra.mxu0 %v925
      %935 = vmatmul.bf16.gmra.mxu0 %v922
      %v936 = vpop.f32.mrf.mxu0
      %v937 = vadd.f32 %v880, %v936
      %v938 = vpop.f32.mrf.mxu0
      %939 = vdwg.mxu0
      %v941 = vsel %vm882, %v869, 0
      %v944 = vsel %vm882, %v873, 0
      %946 = vmatpush.bf16.xpose.msra.mxu0 0
      %947 = vmatpush.bf16.xpose.msra.mxu0 0
      %948 = vmatpush.bf16.xpose.msra.mxu0 0
      %949 = vmatpush.bf16.xpose.msra.mxu0 0
      %950 = vmatpush.bf16.xpose.msra.mxu0 0
      %951 = vmatpush.bf16.xpose.msra.mxu0 0
      %952 = vmatpush.bf16.xpose.msra.mxu0 0
      %953 = vmatpush.bf16.xpose.msra.mxu0 %v944
      %954 = vmatmul.bf16.gmra.mxu0 %v941
      %v955 = vpop.f32.mrf.mxu0
      %v956 = vadd.f32 %v880, %v955
      %v957 = vpop.f32.mrf.mxu0
      %958 = vdwg.mxu0
      %v959 = vsel %vm882, %v899, -inf
      %960 = vmax.xlane.f32.xlu0 %v959
      %v961 = vpop.xlane.xlu0 %960
      %v962 = vsel %vm882, %v918, -inf
      %963 = vmax.xlane.f32.xlu0 %v962
      %v964 = vpop.xlane.xlu0 %963
      %v965 = vsel %vm882, %v937, -inf
      %966 = vmax.xlane.f32.xlu0 %v965
      %v967 = vpop.xlane.xlu0 %966
      %v968 = vsel %vm882, %v956, -inf
      %969 = vmax.xlane.f32.xlu0 %v968
      %v970 = vpop.xlane.xlu0 %969
      %v971 = vsub.f32 %v899, %v961
      %v972 = vsub.f32 %v918, %v964
      %v973 = vsub.f32 %v937, %v967
      %v974 = vsub.f32 %v956, %v970
      %v975 = vmul.f32 %v971, 1.442695
      %v976 = vpow.pop %v975
      %v977 = vmul.f32 %v972, 1.442695
      %v978 = vpow.pop %v977
      %v979 = vmul.f32 %v973, 1.442695
      %v980 = vpow.pop %v979
      %v981 = vmul.f32 %v974, 1.442695
      %v982 = vpow.pop %v981
      %v983 = vsel %vm882, %v976, 0.0
      %984 = vadd.xlane.f32.xlu0 %v983
      %v985 = vpop.xlane.xlu0 %984
      %v986 = vsel %vm882, %v978, 0.0
      %987 = vadd.xlane.f32.xlu0 %v986
      %v988 = vpop.xlane.xlu0 %987
      %v989 = vsel %vm882, %v980, 0.0
      %990 = vadd.xlane.f32.xlu0 %v989
      %v991 = vpop.xlane.xlu0 %990
      %v992 = vsel %vm882, %v982, 0.0
      %993 = vadd.xlane.f32.xlu0 %v992
      %v994 = vpop.xlane.xlu0 %993
      %v995 = vrcp.pop %v985
      %v996 = vrcp.pop %v988
      %v997 = vrcp.pop %v991
      %v998 = vrcp.pop %v994
      %v999 = vmul.f32 %v976, %v995
      %v1000 = vmul.f32 %v978, %v996
      %v1001 = vmul.f32 %v980, %v997
      %v1002 = vmul.f32 %v982, %v998
      %v1003 = vpack.c.bf16 %v999, %v999
      %v1004 = vpack.c.bf16 %v1000, %v1000
      %v1005 = vpack.c.bf16 %v1001, %v1001
      %v1006 = vpack.c.bf16 %v1002, %v1002
      %v1008 = vsel %vm882, %v1003, 0
      %vm1010 = vcmask 1043456
      %v1012 = vsel %vm1010, %v874, 0
      %1014 = vmatpush.bf16.msra.mxu0 0
      %1015 = vmatpush.bf16.msra.mxu0 0
      %1016 = vmatpush.bf16.msra.mxu0 0
      %1017 = vmatpush.bf16.msra.mxu0 0
      %1018 = vmatpush.bf16.msra.mxu0 0
      %1019 = vmatpush.bf16.msra.mxu0 0
      %1020 = vmatpush.bf16.msra.mxu0 0
      %1021 = vmatpush.bf16.msra.mxu0 %v1012
      %1022 = vmatmul.bf16.gmra.mxu0 %v1008
      %v1023 = vpop.f32.mrf.mxu0
      %v1024 = vadd.f32 0.0, %v1023
      %v1025 = vpop.f32.mrf.mxu0
      %1026 = vdwg.mxu0
      %v1028 = vsel %vm882, %v1004, 0
      %v1031 = vsel %vm1010, %v875, 0
      %1033 = vmatpush.bf16.msra.mxu0 0
      %1034 = vmatpush.bf16.msra.mxu0 0
      %1035 = vmatpush.bf16.msra.mxu0 0
      %1036 = vmatpush.bf16.msra.mxu0 0
      %1037 = vmatpush.bf16.msra.mxu0 0
      %1038 = vmatpush.bf16.msra.mxu0 0
      %1039 = vmatpush.bf16.msra.mxu0 0
      %1040 = vmatpush.bf16.msra.mxu0 %v1031
      %1041 = vmatmul.bf16.gmra.mxu0 %v1028
      %v1042 = vpop.f32.mrf.mxu0
      %v1043 = vadd.f32 0.0, %v1042
      %v1044 = vpop.f32.mrf.mxu0
      %1045 = vdwg.mxu0
      %v1047 = vsel %vm882, %v1005, 0
      %v1050 = vsel %vm1010, %v876, 0
      %1052 = vmatpush.bf16.msra.mxu0 0
      %1053 = vmatpush.bf16.msra.mxu0 0
      %1054 = vmatpush.bf16.msra.mxu0 0
      %1055 = vmatpush.bf16.msra.mxu0 0
      %1056 = vmatpush.bf16.msra.mxu0 0
      %1057 = vmatpush.bf16.msra.mxu0 0
      %1058 = vmatpush.bf16.msra.mxu0 0
      %1059 = vmatpush.bf16.msra.mxu0 %v1050
      %1060 = vmatmul.bf16.gmra.mxu0 %v1047
      %v1061 = vpop.f32.mrf.mxu0
      %v1062 = vadd.f32 0.0, %v1061
      %v1063 = vpop.f32.mrf.mxu0
      %1064 = vdwg.mxu0
      %v1066 = vsel %vm882, %v1006, 0
      %v1069 = vsel %vm1010, %v877, 0
      %1071 = vmatpush.bf16.msra.mxu0 0
      %1072 = vmatpush.bf16.msra.mxu0 0
      %1073 = vmatpush.bf16.msra.mxu0 0
      %1074 = vmatpush.bf16.msra.mxu0 0
      %1075 = vmatpush.bf16.msra.mxu0 0
      %1076 = vmatpush.bf16.msra.mxu0 0
      %1077 = vmatpush.bf16.msra.mxu0 0
      %1078 = vmatpush.bf16.msra.mxu0 %v1069
      %1079 = vmatmul.bf16.gmra.mxu0 %v1066
      %v1080 = vpop.f32.mrf.mxu0
      %v1081 = vadd.f32 0.0, %v1080
      %v1082 = vpop.f32.mrf.mxu0
      %1083 = vdwg.mxu0
      %v1084 = vpack.c.bf16 %v1024, %v1024
      %v1085 = vpack.c.bf16 %v1043, %v1043
      %v1086 = vpack.c.bf16 %v1062, %v1062
      %v1087 = vpack.c.bf16 %v1081, %v1081
      %v1088 = vld [vmem:[%s428] sm:$0xf]
      %v1089 = vld [vmem:[%s428 + $0x4] sm:$0xf]
      %v1090 = vld [vmem:[%s428 + $0x8] sm:$0xf]
      %v1091 = vld [vmem:[%s428 + $0xc] sm:$0xf]
      %v1093 = vsel %vm882, %v1084, 0
      %v1096 = vsel %vm1010, %v1088, 0
      %1098 = vmatpush.bf16.msra.mxu0 0
      %1099 = vmatpush.bf16.msra.mxu0 0
      %1100 = vmatpush.bf16.msra.mxu0 0
      %1101 = vmatpush.bf16.msra.mxu0 0
      %1102 = vmatpush.bf16.msra.mxu0 0
      %1103 = vmatpush.bf16.msra.mxu0 0
      %1104 = vmatpush.bf16.msra.mxu0 0
      %1105 = vmatpush.bf16.msra.mxu0 %v1096
      %1106 = vmatmul.bf16.gmra.mxu0 %v1093
      %v1107 = vpop.f32.mrf.mxu0
      %v1108 = vadd.f32 0.0, %v1107
      %v1109 = vpop.f32.mrf.mxu0
      %1110 = vdwg.mxu0
      %v1112 = vsel %vm882, %v1085, 0
      %v1115 = vsel %vm1010, %v1089, 0
      %1117 = vmatpush.bf16.msra.mxu0 0
      %1118 = vmatpush.bf16.msra.mxu0 0
      %1119 = vmatpush.bf16.msra.mxu0 0
      %1120 = vmatpush.bf16.msra.mxu0 0
      %1121 = vmatpush.bf16.msra.mxu0 0
      %1122 = vmatpush.bf16.msra.mxu0 0
      %1123 = vmatpush.bf16.msra.mxu0 0
      %1124 = vmatpush.bf16.msra.mxu0 %v1115
      %1125 = vmatmul.bf16.gmra.mxu0 %v1112
      %v1126 = vpop.f32.mrf.mxu0
      %v1127 = vadd.f32 0.0, %v1126
      %v1128 = vpop.f32.mrf.mxu0
      %1129 = vdwg.mxu0
      %v1131 = vsel %vm882, %v1086, 0
      %v1134 = vsel %vm1010, %v1090, 0
      %1136 = vmatpush.bf16.msra.mxu0 0
      %1137 = vmatpush.bf16.msra.mxu0 0
      %1138 = vmatpush.bf16.msra.mxu0 0
      %1139 = vmatpush.bf16.msra.mxu0 0
      %1140 = vmatpush.bf16.msra.mxu0 0
      %1141 = vmatpush.bf16.msra.mxu0 0
      %1142 = vmatpush.bf16.msra.mxu0 0
      %1143 = vmatpush.bf16.msra.mxu0 %v1134
      %1144 = vmatmul.bf16.gmra.mxu0 %v1131
      %v1145 = vpop.f32.mrf.mxu0
      %v1146 = vadd.f32 0.0, %v1145
      %v1147 = vpop.f32.mrf.mxu0
      %1148 = vdwg.mxu0
      %v1150 = vsel %vm882, %v1087, 0
      %v1153 = vsel %vm1010, %v1091, 0
      %1155 = vmatpush.bf16.msra.mxu0 0
      %1156 = vmatpush.bf16.msra.mxu0 0
      %1157 = vmatpush.bf16.msra.mxu0 0
      %1158 = vmatpush.bf16.msra.mxu0 0
      %1159 = vmatpush.bf16.msra.mxu0 0
      %1160 = vmatpush.bf16.msra.mxu0 0
      %1161 = vmatpush.bf16.msra.mxu0 0
      %1162 = vmatpush.bf16.msra.mxu0 %v1153
      %1163 = vmatmul.bf16.gmra.mxu0 %v1150
      %v1164 = vpop.f32.mrf.mxu0
      %v1165 = vadd.f32 0.0, %v1164
      %v1166 = vpop.f32.mrf.mxu0
      %1167 = vdwg.mxu0
      %v1168 = vsel %vm570, %v1108, 0.0
      %v1169 = vsel %vm570, %v1127, 0.0
      %v1170 = vadd.f32 %v1168, %v1169
      %v1171 = vsel %vm570, %v1146, 0.0
      %v1172 = vadd.f32 %v1170, %v1171
      %v1173 = vsel %vm570, %v1165, 0.0
      %v1174 = vadd.f32 %v1172, %v1173
      %v1175 = vperm.slane %v460, 0
      %v1176 = vadd.f32 %v1174, %v1175
      %v1177 = vadd.f32 %v459, %v1176
      %v1178 = vsel %vm570, %v1177, 0.0
      %1179 = vadd.xlane.f32.xlu0 %v1178
      %v1180 = vpop.xlane.xlu0 %1179
      %v1181 = vrcp.pop 32.0
      %v1182 = vmul.f32 32.0, %v1181
      %v1183 = vsub.f32 1.0, %v1182
      %v1184 = vmul.f32 %v1181, %v1183
      %v1185 = vadd.f32 %v1181, %v1184
      %vm1186 = vweird.f32 %v1181
      %v1187 = vsel %vm1186, %v1181, %v1185
      %v1188 = vmul.f32 %v1180, %v1187
      %v1189 = vsub.f32 %v1177, %v1188
      %v1190 = vmul.f32 %v1189, %v1189
      %v1191 = vsel %vm570, %v1190, 0.0
      %1192 = vadd.xlane.f32.xlu0 %v1191
      %v1193 = vpop.xlane.xlu0 %1192
      %v1194 = vmul.f32 %v1193, %v1187
      %v1195 = vadd.f32 %v1194, 1e-05
      %v1196 = vrsqrt.pop %v1195
      %v1197 = vmul.f32 %v1196, %v1195
      %v1198 = vmul.f32 %v1197, %v1196
      %v1199 = vmul.f32 0.5, %v1198
      %v1200 = vsub.f32 1.5, %v1199
      %v1201 = vmul.f32 %v1196, %v1200
      %vm1202 = vweird.f32 %v1195
      %vm1203 = vweird.f32 %v1196
      %vm1204 = vmor %vm1202, %vm1203
      %v1205 = vsel %vm1204, %v1196, %v1201
      %v1206 = vmul.f32 %v1189, %v1205
      %v1207 = vperm.slane %v460, 1
      %v1208 = vmul.f32 %v1206, %v1207
      %v1209 = vperm.slane %v460, 2
      %v1210 = vadd.f32 %v1208, %v1209
      %v1211 = vpack.c.bf16 %v1210, %v1210
      %v1212 = vld [vmem:[%s433] sm:$0xf]
      %v1213 = vld [vmem:[%s433 + $0x4] sm:$0xf]
      %v1214 = vld [vmem:[%s433 + $0x8] sm:$0xf]
      %v1215 = vld [vmem:[%s433 + $0xc] sm:$0xf]
      %v1216 = vperm.slane %v460, 3
      %v1221 = vunpack.c.l.b16 %v1212
      %v1222 = vunpack.c.l.b16 %v1213
      %v1223 = vunpack.c.l.b16 %v1214
      %v1224 = vunpack.c.l.b16 %v1215
      %v1225 = vpack.c.b16 %v1222, %v1221
      %v1226 = vpack.c.b16 %v1224, %v1223
      %v1230 = vsel %vm570, %v1211, 0
      %1232 = vmatpush.bf16.msra.mxu0 0
      %1233 = vmatpush.bf16.msra.mxu0 0
      %1234 = vmatpush.bf16.msra.mxu0 0
      %1235 = vmatpush.bf16.msra.mxu0 0
      %1236 = vmatpush.bf16.msra.mxu0 0
      %1237 = vmatpush.bf16.msra.mxu0 0
      %1238 = vmatpush.bf16.msra.mxu0 %v1226
      %1239 = vmatpush.bf16.msra.mxu0 %v1225
      %1240 = vmatmul.bf16.gmra.mxu0 %v1230
      %v1241 = vpop.f32.mrf.mxu0
      %v1242 = vadd.f32 %v1216, %v1241
      %v1243 = vpop.f32.mrf.mxu0
      %1244 = vdwg.mxu0
      %v1245 = vmax.f32 %v1242, 0.0
      %v1246 = vpack.c.bf16 %v1245, %v1245
      %v1247 = vld [vmem:[%s438] sm:$0xf]
      %v1248 = vld [vmem:[%s438 + $0x4] sm:$0xf]
      %v1249 = vld [vmem:[%s438 + $0x8] sm:$0xf]
      %v1250 = vld [vmem:[%s438 + $0xc] sm:$0xf]
      %v1251 = vld [vmem:[%s438 + $0x10] sm:$0xf]
      %v1252 = vld [vmem:[%s438 + $0x14] sm:$0xf]
      %v1253 = vld [vmem:[%s438 + $0x18] sm:$0xf]
      %v1254 = vld [vmem:[%s438 + $0x1c] sm:$0xf]
      %v1255 = vperm.slane %v460, 4
      %v1264 = vunpack.c.l.b16 %v1247
      %v1265 = vunpack.c.l.b16 %v1248
      %v1266 = vunpack.c.l.b16 %v1249
      %v1267 = vunpack.c.l.b16 %v1250
      %v1268 = vunpack.c.l.b16 %v1251
      %v1269 = vunpack.c.l.b16 %v1252
      %v1270 = vunpack.c.l.b16 %v1253
      %v1271 = vunpack.c.l.b16 %v1254
      %v1272 = vpack.c.b16 %v1265, %v1264
      %v1273 = vpack.c.b16 %v1267, %v1266
      %v1274 = vpack.c.b16 %v1269, %v1268
      %v1275 = vpack.c.b16 %v1271, %v1270
      %vm1280 = vcmask 523264
      %v1282 = vsel %vm1280, %v1246, 0
      %1284 = vmatpush.bf16.msra.mxu0 0
      %1285 = vmatpush.bf16.msra.mxu0 0
      %1286 = vmatpush.bf16.msra.mxu0 0
      %1287 = vmatpush.bf16.msra.mxu0 0
      %1288 = vmatpush.bf16.msra.mxu0 %v1275
      %1289 = vmatpush.bf16.msra.mxu0 %v1274
      %1290 = vmatpush.bf16.msra.mxu0 %v1273
      %1291 = vmatpush.bf16.msra.mxu0 %v1272
      %1292 = vmatmul.bf16.gmra.mxu0 %v1282
      %v1293 = vpop.f32.mrf.mxu0
      %v1294 = vadd.f32 %v1255, %v1293
      %v1295 = vpop.f32.mrf.mxu0
      %1296 = vdwg.mxu0
      %v1297 = vadd.f32 %v1210, %v1294
      %v1298 = vsel %vm570, %v1297, 0.0
      %1299 = vadd.xlane.f32.xlu0 %v1298
      %v1300 = vpop.xlane.xlu0 %1299
      %v1301 = vmul.f32 %v1300, %v1187
      %v1302 = vsub.f32 %v1297, %v1301
      %v1303 = vmul.f32 %v1302, %v1302
      %v1304 = vsel %vm570, %v1303, 0.0
      %1305 = vadd.xlane.f32.xlu0 %v1304
      %v1306 = vpop.xlane.xlu0 %1305
      %v1307 = vmul.f32 %v1306, %v1187
      %v1308 = vadd.f32 %v1307, 1e-05
      %v1309 = vrsqrt.pop %v1308
      %v1310 = vmul.f32 %v1309, %v1308
      %v1311 = vmul.f32 %v1310, %v1309
      %v1312 = vmul.f32 0.5, %v1311
      %v1313 = vsub.f32 1.5, %v1312
      %v1314 = vmul.f32 %v1309, %v1313
      %vm1315 = vweird.f32 %v1308
      %vm1316 = vweird.f32 %v1309
      %vm1317 = vmor %vm1315, %vm1316
      %v1318 = vsel %vm1317, %v1309, %v1314
      %v1319 = vmul.f32 %v1302, %v1318
      %v1320 = vperm.slane %v460, 5
      %v1321 = vmul.f32 %v1319, %v1320
      %v1322 = vperm.slane %v460, 6
      %v1323 = vadd.f32 %v1321, %v1322
      %1324 = vst.msk [vmem:[#allocation2] sm:$0xff] %vm570, %v1323
      %1325 = vst.msk [vmem:[%s450] sm:$0xff] %vm570, %v1323
      %p1326 = scmp.lt.s32.totalorder %s24, 1
      %s1327 = scalar_select %p1326, %s24, 1
      %p1328 = scmp.lt.s32.totalorder %s23, 1
      %s1329 = scalar_select %p1328, %s23, 1
      %s1330 = smul.addr %s1327, 2
      %s1331 = sadd.s32 %s1329, %s1330
      %s1332 = smul.addr %s1331, 8
      %s1333 = scalar_lea.vmem %s8, %s1332
      // Predicated region
      $region57: #{transformer_sentence_encoder_forward.1} parent=51 // pred_check
        %p1334 = pneg %p259
      $region58: #{transformer_sentence_encoder_forward.1} parent=51 // pred_check_branch
        %1336 = sbr.rel (%p1334) target = $region60
      $region59: #{transformer_sentence_encoder_forward.1} parent=51 // pred_region
        _
      $region60: #{transformer_sentence_encoder_forward.1} parent=51 // pred_fallthru
        _
    $region52: #{transformer_sentence_encoder_forward.1} parent=5 // pred_fallthru
      _
    %p1337 = scmp.le.s32.totalorder 2, %s14
    // Predicated region
    $region61: #{transformer_sentence_encoder_forward.1} parent=5 // pred_check
      %p1338 = pneg %p1337
    $region62: #{transformer_sentence_encoder_forward.1} parent=5 // pred_check_branch
      %1340 = sbr.rel (%p1338) target = $region64
    $region63: #{transformer_sentence_encoder_forward.1} parent=5 // pred_region
      %s1341 = ssub.s32 %s14, 2
      // Predicated region
      $region65: #{transformer_sentence_encoder_forward.1} parent=63 // pred_check
        %p1342 = pneg %p265
      $region66: #{transformer_sentence_encoder_forward.1} parent=63 // pred_check_branch
        %1344 = sbr.rel (%p1342) target = $region68
      $region67: #{transformer_sentence_encoder_forward.1} parent=63 // pred_region
        %p1345 = scmp.lt.s32.totalorder %s26, 1
        %s1346 = scalar_select %p1345, %s26, 1
        %p1347 = scmp.lt.s32.totalorder %s25, 1
        %s1348 = scalar_select %p1347, %s25, 1
        %s1349 = smul.addr %s1346, 2
        %s1350 = sadd.s32 %s1348, %s1349
        %s1351 = smul.addr %s1350, 8
        %s1352 = scalar_lea.vmem %s8, %s1351
      $region68: #{transformer_sentence_encoder_forward.1} parent=63 // pred_fallthru
        _
    $region64: #{transformer_sentence_encoder_forward.1} parent=5 // pred_fallthru
      _
  $region6: #{transformer_sentence_encoder_forward.1} parent=0 // loop_footer
    %s18 = sadd.s32 1, %s14
  $region7: #{transformer_sentence_encoder_forward.1} parent=0 // loop_footer_branch
    %13 = sbr.rel target = $region3
  $region8: #{transformer_sentence_encoder_forward.1} parent=0 // loop_exit
    _

</llo_original>
